<compile_context>
chip_gen: v7x
topology: tpu7x:2x2x1
jax: 0.10.0
libtpu: 0.0.40
codegen_flags: <defaults>
</compile_context>

<pallas_src>
import functools
import math

import jax
import jax.numpy as jnp
from jax.experimental import pallas as pl
from jax.experimental.pallas import tpu as pltpu


def _round_up(x, m):
    return ((x + m - 1) // m) * m


# ----------------------------------------------------------------------------
# VMEM budget (generation-aware, cached)
# ----------------------------------------------------------------------------
@functools.lru_cache(maxsize=1)
def _vmem_budget_bytes():
    cap = 64 * 1024 * 1024
    try:
        info = pltpu.get_tpu_info()
        cap = int(getattr(info, "vmem_capacity_bytes", cap))
    except Exception:
        pass
    # Leave half of physical VMEM as headroom; clamp to a sane range.
    return max(32 * 1024 * 1024, min(cap // 2, 96 * 1024 * 1024))


def _choose_tm(mp, k, n1p, n2p, budget):
    """Largest M tile that keeps resident weights + double-buffered col/out
    blocks under the VMEM budget.  Single tile whenever possible."""
    nout = n2p if n2p else n1p
    w_bytes = n1p * k * 2 + (n2p * n1p * 2 if n2p else 0)

    def fits(tm):
        col_b = 2 * k * tm * 2        # double-buffered bf16 col block
        out_b = 2 * nout * tm * 2     # double-buffered bf16 out block
        return w_bytes + col_b + out_b <= int(budget * 0.75)

    if fits(mp):
        return mp
    for t in (8192, 4096, 2048, 1024, 512, 256, 128):
        if t < mp and mp % t == 0 and fits(t):
            return t
    return 128


# ----------------------------------------------------------------------------
# Pallas kernels: full-K, weight-resident GEMM with fused LeakyReLU epilogue
# ----------------------------------------------------------------------------
def _gemm_kernel(w_ref, x_ref, o_ref, *, slope1):
    acc = jnp.dot(w_ref[...], x_ref[...], preferred_element_type=jnp.float32)
    if slope1 is not None:
        acc = jnp.where(acc >= 0.0, acc, acc * slope1)
    o_ref[...] = acc.astype(o_ref.dtype)


def _gemm_fused2_kernel(w1_ref, w2_ref, x_ref, o_ref, *, slope1, slope2):
    # conv -> LeakyReLU -> chained 1x1 conv -> LeakyReLU, all in one kernel.
    y1 = jnp.dot(w1_ref[...], x_ref[...], preferred_element_type=jnp.float32)
    if slope1 is not None:
        y1 = jnp.where(y1 >= 0.0, y1, y1 * slope1)
    acc = jnp.dot(w2_ref[...], y1.astype(jnp.bfloat16),
                  preferred_element_type=jnp.float32)
    if slope2 is not None:
        acc = jnp.where(acc >= 0.0, acc, acc * slope2)
    o_ref[...] = acc.astype(o_ref.dtype)


def pallas_conv_gemm(w1, col, *, slope1=None, w2=None, slope2=None,
                     out_dtype=jnp.bfloat16):
    """[n1p, K] @ [K, M] (-> optional [n2p, n1p] @ .) -> ([nout_p, Mp], Mp)."""
    n1p, k = w1.shape
    k2, m = col.shape
    assert k == k2, (w1.shape, col.shape)

    mp = _round_up(m, 128)
    if mp != m:
        col = jnp.pad(col, ((0, 0), (0, mp - m)))

    budget = _vmem_budget_bytes()
    n2p = w2.shape[0] if w2 is not None else None
    nout = n2p if n2p else n1p
    tm = _choose_tm(mp, k, n1p, n2p, budget)
    grid = (mp // tm,)                # M only; K is fully resident (small)

    in_specs = [pl.BlockSpec((n1p, k), lambda mi: (0, 0))]   # weight: resident
    operands = [w1]
    if w2 is not None:
        in_specs.append(pl.BlockSpec((n2p, n1p), lambda mi: (0, 0)))
        operands.append(w2)
        kern = functools.partial(_gemm_fused2_kernel,
                                 slope1=slope1, slope2=slope2)
    else:
        kern = functools.partial(_gemm_kernel, slope1=slope1)
    in_specs.append(pl.BlockSpec((k, tm), lambda mi: (0, mi)))
    operands.append(col)

    out = pl.pallas_call(
        kern,
        out_shape=jax.ShapeDtypeStruct((nout, mp), out_dtype),
        grid=grid,
        in_specs=in_specs,
        out_specs=pl.BlockSpec((nout, tm), lambda mi: (0, mi)),
        compiler_params=pltpu.CompilerParams(
            dimension_semantics=("parallel",),
            vmem_limit_bytes=budget),
    )(*operands)
    return out, mp


# ----------------------------------------------------------------------------
# im2col in CBHW layout (K-major, spatial last -> no transpose, K exact)
# ----------------------------------------------------------------------------
def _im2col_cbhw(x, kh, kw, stride, dilation, padding):
    """x: [C, B, H, W] -> col [C*kh*kw, B*OH*OW], K-order (ci, i, j)."""
    c, b, h, w = x.shape
    sh, sw = stride
    dh, dw = dilation
    ph, pw = padding
    xp = jnp.pad(x, ((0, 0), (0, 0), (ph, ph), (pw, pw)))
    hp, wp = h + 2 * ph, w + 2 * pw
    oh = (hp - dh * (kh - 1) - 1) // sh + 1
    ow = (wp - dw * (kw - 1) - 1) // sw + 1
    patches = []
    for i in range(kh):
        for j in range(kw):
            h0, w0 = i * dh, j * dw
            patches.append(xp[:, :, h0:h0 + sh * oh:sh, w0:w0 + sw * ow:sw])
    col = jnp.stack(patches, axis=1).reshape(c * kh * kw, b * oh * ow)
    return col, oh, ow


def conv2d_cbhw(x, layer, stride=(1, 1), dilation=(1, 1), padding=(0, 0),
                neg_slope=None):
    """Conv2d (bias=False) on CBHW bf16 activations with pre-packed weights."""
    w = layer["w"]
    cout, kh, kw = layer["cout"], layer["kh"], layer["kw"]
    c, b, h, wd = x.shape
    if kh == 1 and kw == 1 and stride == (1, 1) and padding == (0, 0):
        col = x.reshape(c, b * h * wd)                 # 1x1: free reshape
        oh, ow = h, wd
    else:
        col, oh, ow = _im2col_cbhw(x, kh, kw, stride, dilation, padding)
    out, mp = pallas_conv_gemm(w, col, slope1=neg_slope)
    m = b * oh * ow
    if out.shape[0] != cout or mp != m:
        out = out[:cout, :m]
    return out.reshape(cout, b, oh, ow)


# ----------------------------------------------------------------------------
# Pixel shuffles in CBHW layout (small XLA relayout glue)
# ----------------------------------------------------------------------------
def pixel_shuffle_cbhw(x, r):
    """nn.PixelShuffle: [c*r*r, b, h, w] -> [c, b, h*r, w*r]."""
    cr2, b, h, w = x.shape
    c = cr2 // (r * r)
    x = x.reshape(c, r, r, b, h, w).transpose(0, 3, 4, 1, 5, 2)
    return x.reshape(c, b, h * r, w * r)


def pixel_shuffle_1d_w(x, r):
    """PixelShuffle1D along W (factor-major channels): [r*c,b,h,w]->[c,b,h,w*r]."""
    rc, b, h, w = x.shape
    c = rc // r
    x = x.reshape(r, c, b, h, w).transpose(1, 2, 3, 4, 0)
    return x.reshape(c, b, h, w * r)


def pixel_shuffle_1d_h(x, r):
    """PixelShuffle1D along H: [r*c, b, h, w] -> [c, b, h*r, w]."""
    rc, b, h, w = x.shape
    c = rc // r
    x = x.reshape(r, c, b, h, w).transpose(1, 2, 3, 0, 4)
    return x.reshape(c, b, h * r, w)


# ----------------------------------------------------------------------------
# Parameter init + packing (weights pre-reshaped / padded / bf16 once)
# ----------------------------------------------------------------------------
def _init_conv(key, cout, cin, kh, kw):
    fan_in = cin * kh * kw
    return jax.random.normal(key, (cout, cin, kh, kw),
                             jnp.float32) / math.sqrt(fan_in)


def _pack(w):
    """Pack [cout,cin,kh,kw] -> [round_up(cout,16), cin*kh*kw] bf16 (K exact)."""
    cout, cin, kh, kw = w.shape
    k = cin * kh * kw
    np_ = _round_up(cout, 16)           # bf16 native (16,128) sublane tiling
    wm = jnp.pad(w.reshape(cout, k), ((0, np_ - cout), (0, 0)))
    return dict(w=wm.astype(jnp.bfloat16), cout=cout, cin=cin, kh=kh, kw=kw)


def _pack_1x1(w, cin_pad):
    """Pack a 1x1 conv whose K must match the padded Cout of the previous GEMM."""
    cout, cin, kh, kw = w.shape
    assert kh == 1 and kw == 1
    np_ = _round_up(cout, 16)
    wm = jnp.pad(w.reshape(cout, cin), ((0, np_ - cout), (0, cin_pad - cin)))
    return dict(w=wm.astype(jnp.bfloat16), cout=cout, cin=cin, kh=1, kw=1)


def init_block(key, a, c):
    spa_c, ang_c, epi_c = c, c // 4, c // 2
    ks = jax.random.split(key, 8)
    ang1 = _pack(_init_conv(ks[2], ang_c, c, a, a))
    epi1 = _pack(_init_conv(ks[4], epi_c, c, 1, a * a))
    return dict(
        spa1=_pack(_init_conv(ks[0], spa_c, c, 3, 3)),
        spa2=_pack(_init_conv(ks[1], spa_c, spa_c, 3, 3)),
        ang1=ang1,
        ang2=_pack_1x1(_init_conv(ks[3], a * a * ang_c, ang_c, 1, 1),
                       ang1["w"].shape[0]),
        epi1=epi1,
        epi2=_pack_1x1(_init_conv(ks[5], a * epi_c, epi_c, 1, 1),
                       epi1["w"].shape[0]),
        fuse1=_pack(_init_conv(ks[6], c, spa_c + ang_c + 2 * epi_c, 1, 1)),
        fuse2=_pack(_init_conv(ks[7], c, c, 3, 3)),
    )


def init_group(key, n_block, a, c):
    ks = jax.random.split(key, n_block + 1)
    return dict(blocks=[init_block(ks[i], a, c) for i in range(n_block)],
                conv=_pack(_init_conv(ks[-1], c, c, 3, 3)))


def init_cascade(key, n_group, n_block, a, c):
    ks = jax.random.split(key, n_group + 1)
    return dict(groups=[init_group(ks[i], n_block, a, c)
                        for i in range(n_group)],
                conv=_pack(_init_conv(ks[-1], c, c, 3, 3)))


# ----------------------------------------------------------------------------
# Forward passes (match the PyTorch modules, CBHW/bf16 internally)
# ----------------------------------------------------------------------------
def disentg_block_fwd(p, x, a):
    b = x.shape[1]

    # Spatial branch: two dilated 3x3 convs + LeakyReLU(0.1)
    fea_spa = conv2d_cbhw(x, p["spa1"], dilation=(a, a), padding=(a, a),
                          neg_slope=0.1)
    fea_spa = conv2d_cbhw(fea_spa, p["spa2"], dilation=(a, a), padding=(a, a),
                          neg_slope=0.1)

    # Angular branch: angRes-strided conv with the 1x1 conv fused into the
    # GEMM epilogue -> single pallas_call, then PixelShuffle.
    col, oh, ow = _im2col_cbhw(x, a, a, (a, a), (1, 1), (0, 0))
    y2, _ = pallas_conv_gemm(p["ang1"]["w"], col, slope1=0.1,
                             w2=p["ang2"]["w"], slope2=0.1)
    c2 = p["ang2"]["cout"]
    m = b * oh * ow
    fea_ang = pixel_shuffle_cbhw(y2[:c2, :m].reshape(c2, b, oh, ow), a)

    # EPI branch: horizontal + vertical share the same weights (as in the
    # reference) and one fused GEMM (concat along M).  The vertical direction
    # is expressed as an H-direction conv + H-direction pixel shuffle, so no
    # spatial transpose of activations is materialized.
    pad = a * (a - 1) // 2
    col_h, ohh, owh = _im2col_cbhw(x, 1, a * a, (1, a), (1, 1), (0, pad))
    col_v, ohv, owv = _im2col_cbhw(x, a * a, 1, (a, 1), (1, 1), (pad, 0))
    mh, mv = b * ohh * owh, b * ohv * owv
    col = jnp.concatenate([col_h, col_v], axis=1)
    z2, _ = pallas_conv_gemm(p["epi1"]["w"], col, slope1=0.1,
                             w2=p["epi2"]["w"], slope2=0.1)
    ce = p["epi2"]["cout"]
    fea_epi_h = pixel_shuffle_1d_w(z2[:ce, :mh].reshape(ce, b, ohh, owh), a)
    fea_epi_v = pixel_shuffle_1d_h(
        z2[:ce, mh:mh + mv].reshape(ce, b, ohv, owv), a)

    buf = jnp.concatenate([fea_spa, fea_ang, fea_epi_h, fea_epi_v], axis=0)
    buf = conv2d_cbhw(buf, p["fuse1"], neg_slope=0.1)
    buf = conv2d_cbhw(buf, p["fuse2"], dilation=(a, a), padding=(a, a))
    return buf + x


def disentg_group_fwd(p, x, a):
    buf = x
    for bp in p["blocks"]:
        buf = disentg_block_fwd(bp, buf, a)
    return conv2d_cbhw(buf, p["conv"], dilation=(a, a), padding=(a, a)) + x


def cascade_disentg_group_fwd(p, x_nchw, a):
    # NCHW f32 -> CBHW bf16 once at the boundary, back once at the end.
    x = x_nchw.astype(jnp.bfloat16).transpose(1, 0, 2, 3)
    buf = x
    for gp in p["groups"]:
        buf = disentg_group_fwd(gp, buf, a)
    out = conv2d_cbhw(buf, p["conv"], dilation=(a, a), padding=(a, a)) + x
    return out.transpose(1, 0, 2, 3).astype(jnp.float32)


# ----------------------------------------------------------------------------
# Main
# ----------------------------------------------------------------------------
if __name__ == "__main__":
    N_GROUP, N_BLOCK, ANG_RES, CHANNELS = 2, 2, 2, 8
    B = 2
    H = W = ANG_RES * 8  # 16x16 macro-pixel light-field feature map

    key = jax.random.PRNGKey(0)
    k_param, k_input = jax.random.split(key)
    params = init_cascade(k_param, N_GROUP, N_BLOCK, ANG_RES, CHANNELS)
    x = jax.random.normal(k_input, (B, CHANNELS, H, W), jnp.float32)

    fwd = jax.jit(functools.partial(cascade_disentg_group_fwd, params,
                                    a=ANG_RES))
    y = jax.block_until_ready(fwd(x))

    assert y.shape == (B, CHANNELS, H, W), y.shape
    assert y.dtype == jnp.float32
    assert bool(jnp.all(jnp.isfinite(y)))
    print("KERNEL_OK")
</pallas_src>

<mosaic_0001>
module attributes {stable_mosaic.version = 11 : i64} {
  func.func @_gemm_kernel(%arg0: i32, %arg1: memref<16x72xbf16, #tpu.memory_space<vmem>>, %arg2: memref<72x512xbf16, #tpu.memory_space<vmem>>, %arg3: memref<16x512xbf16, #tpu.memory_space<vmem>>) attributes {dimension_semantics = [#tpu.dimension_semantics<parallel>], iteration_bounds = array<i64: 1>, scalar_prefetch = 0 : i64, scratch_operands = 0 : i64, tpu.core_type = #tpu.core_type<tc>, window_params = [{pipeline_mode = #tpu.pipeline_mode<synchronous>, transform_indices = @transform_0, window_bounds = array<i64: 16, 72>}, {transform_indices = @transform_1, window_bounds = array<i64: 72, 512>}, {transform_indices = @transform_2, window_bounds = array<i64: 16, 512>}]} {
    %c0 = arith.constant 0 : index
    %c0_0 = arith.constant 0 : index
    %0 = vector.load %arg1[%c0, %c0_0] : memref<16x72xbf16, #tpu.memory_space<vmem>>, vector<16x72xbf16>
    %c0_1 = arith.constant 0 : index
    %c0_2 = arith.constant 0 : index
    %1 = vector.load %arg2[%c0_1, %c0_2] : memref<72x512xbf16, #tpu.memory_space<vmem>>, vector<72x512xbf16>
    %cst = arith.constant dense<0.000000e+00> : vector<16x512xf32>
    %2 = tpu.matmul %0, %1, %cst {dimension_numbers = #tpu.dot_dimension_numbers<[1], [0], [0], [1], [0, 0, 1, 1], [], []>} : vector<16x72xbf16>, vector<72x512xbf16>, vector<16x512xf32> -> vector<16x512xf32>
    %cst_3 = arith.constant 0.000000e+00 : f32
    %3 = vector.broadcast %cst_3 : f32 to vector<16x512xf32>
    %4 = arith.cmpf oge, %2, %3 : vector<16x512xf32>
    %cst_4 = arith.constant 1.000000e-01 : f32
    %5 = vector.broadcast %cst_4 : f32 to vector<16x512xf32>
    %6 = arith.mulf %2, %5 : vector<16x512xf32>
    %7 = arith.select %4, %2, %6 : vector<16x512xi1>, vector<16x512xf32>
    %8 = arith.truncf %7 : vector<16x512xf32> to vector<16x512xbf16>
    %c0_5 = arith.constant 0 : index
    %c0_6 = arith.constant 0 : index
    %9 = vector.load %arg3[%c0_5, %c0_6] : memref<16x512xbf16, #tpu.memory_space<vmem>>, vector<16x512xbf16>
    tpu.vector_store %arg3[%c0_5, %c0_6], %8 {strides = array<i32>} : memref<16x512xbf16, #tpu.memory_space<vmem>>, vector<16x512xbf16>,
    return
  }
  func.func @transform_0(%arg0: i32) -> (i32, i32) {
    %c0_i32 = arith.constant 0 : i32
    %c0_i32_0 = arith.constant 0 : i32
    %c0_i32_1 = arith.constant 0 : i32
    return %c0_i32, %c0_i32_0 : i32, i32
  }
  func.func @transform_1(%arg0: i32) -> (i32, i32) {
    %c0_i32 = arith.constant 0 : i32
    %c0_i32_0 = arith.constant 0 : i32
    return %c0_i32, %arg0 : i32, i32
  }
  func.func @transform_2(%arg0: i32) -> (i32, i32) {
    %c0_i32 = arith.constant 0 : i32
    %c0_i32_0 = arith.constant 0 : i32
    return %c0_i32, %arg0 : i32, i32
  }
}

module attributes {stable_mosaic.version = 11 : i64} {
  func.func @_gemm_fused2_kernel(%arg0: i32, %arg1: memref<16x32xbf16, #tpu.memory_space<vmem>>, %arg2: memref<16x16xbf16, #tpu.memory_space<vmem>>, %arg3: memref<32x512xbf16, #tpu.memory_space<vmem>>, %arg4: memref<16x512xbf16, #tpu.memory_space<vmem>>) attributes {dimension_semantics = [#tpu.dimension_semantics<parallel>], iteration_bounds = array<i64: 1>, scalar_prefetch = 0 : i64, scratch_operands = 0 : i64, tpu.core_type = #tpu.core_type<tc>, window_params = [{pipeline_mode = #tpu.pipeline_mode<synchronous>, transform_indices = @transform_0, window_bounds = array<i64: 16, 32>}, {pipeline_mode = #tpu.pipeline_mode<synchronous>, transform_indices = @transform_1, window_bounds = array<i64: 16, 16>}, {transform_indices = @transform_2, window_bounds = array<i64: 32, 512>}, {transform_indices = @transform_3, window_bounds = array<i64: 16, 512>}]} {
    %c0 = arith.constant 0 : index
    %c0_0 = arith.constant 0 : index
    %0 = vector.load %arg1[%c0, %c0_0] : memref<16x32xbf16, #tpu.memory_space<vmem>>, vector<16x32xbf16>
    %c0_1 = arith.constant 0 : index
    %c0_2 = arith.constant 0 : index
    %1 = vector.load %arg3[%c0_1, %c0_2] : memref<32x512xbf16, #tpu.memory_space<vmem>>, vector<32x512xbf16>
    %cst = arith.constant dense<0.000000e+00> : vector<16x512xf32>
    %2 = tpu.matmul %0, %1, %cst {dimension_numbers = #tpu.dot_dimension_numbers<[1], [0], [0], [1], [0, 0, 1, 1], [], []>} : vector<16x32xbf16>, vector<32x512xbf16>, vector<16x512xf32> -> vector<16x512xf32>
    %cst_3 = arith.constant 0.000000e+00 : f32
    %3 = vector.broadcast %cst_3 : f32 to vector<16x512xf32>
    %4 = arith.cmpf oge, %2, %3 : vector<16x512xf32>
    %cst_4 = arith.constant 1.000000e-01 : f32
    %5 = vector.broadcast %cst_4 : f32 to vector<16x512xf32>
    %6 = arith.mulf %2, %5 : vector<16x512xf32>
    %7 = arith.select %4, %2, %6 : vector<16x512xi1>, vector<16x512xf32>
    %c0_5 = arith.constant 0 : index
    %c0_6 = arith.constant 0 : index
    %8 = vector.load %arg2[%c0_5, %c0_6] : memref<16x16xbf16, #tpu.memory_space<vmem>>, vector<16x16xbf16>
    %9 = arith.truncf %7 : vector<16x512xf32> to vector<16x512xbf16>
    %cst_7 = arith.constant dense<0.000000e+00> : vector<16x512xf32>
    %10 = tpu.matmul %8, %9, %cst_7 {dimension_numbers = #tpu.dot_dimension_numbers<[1], [0], [0], [1], [0, 0, 1, 1], [], []>} : vector<16x16xbf16>, vector<16x512xbf16>, vector<16x512xf32> -> vector<16x512xf32>
    %cst_8 = arith.constant 0.000000e+00 : f32
    %11 = vector.broadcast %cst_8 : f32 to vector<16x512xf32>
    %12 = arith.cmpf oge, %10, %11 : vector<16x512xf32>
    %cst_9 = arith.constant 1.000000e-01 : f32
    %13 = vector.broadcast %cst_9 : f32 to vector<16x512xf32>
    %14 = arith.mulf %10, %13 : vector<16x512xf32>
    %15 = arith.select %12, %10, %14 : vector<16x512xi1>, vector<16x512xf32>
    %16 = arith.truncf %15 : vector<16x512xf32> to vector<16x512xbf16>
    %c0_10 = arith.constant 0 : index
    %c0_11 = arith.constant 0 : index
    %17 = vector.load %arg4[%c0_10, %c0_11] : memref<16x512xbf16, #tpu.memory_space<vmem>>, vector<16x512xbf16>
    tpu.vector_store %arg4[%c0_10, %c0_11], %16 {strides = array<i32>} : memref<16x512xbf16, #tpu.memory_space<vmem>>, vector<16x512xbf16>,
    return
  }
  func.func @transform_0(%arg0: i32) -> (i32, i32) {
    %c0_i32 = arith.constant 0 : i32
    %c0_i32_0 = arith.constant 0 : i32
    %c0_i32_1 = arith.constant 0 : i32
    return %c0_i32, %c0_i32_0 : i32, i32
  }
  func.func @transform_1(%arg0: i32) -> (i32, i32) {
    %c0_i32 = arith.constant 0 : i32
    %c0_i32_0 = arith.constant 0 : i32
    %c0_i32_1 = arith.constant 0 : i32
    return %c0_i32, %c0_i32_0 : i32, i32
  }
  func.func @transform_2(%arg0: i32) -> (i32, i32) {
    %c0_i32 = arith.constant 0 : i32
    %c0_i32_0 = arith.constant 0 : i32
    return %c0_i32, %arg0 : i32, i32
  }
  func.func @transform_3(%arg0: i32) -> (i32, i32) {
    %c0_i32 = arith.constant 0 : i32
    %c0_i32_0 = arith.constant 0 : i32
    return %c0_i32, %arg0 : i32, i32
  }
}

module attributes {stable_mosaic.version = 11 : i64} {
  func.func @_gemm_fused2_kernel(%arg0: i32, %arg1: memref<16x32xbf16, #tpu.memory_space<vmem>>, %arg2: memref<16x16xbf16, #tpu.memory_space<vmem>>, %arg3: memref<32x128xbf16, #tpu.memory_space<vmem>>, %arg4: memref<16x128xbf16, #tpu.memory_space<vmem>>) attributes {dimension_semantics = [#tpu.dimension_semantics<parallel>], iteration_bounds = array<i64: 1>, scalar_prefetch = 0 : i64, scratch_operands = 0 : i64, tpu.core_type = #tpu.core_type<tc>, window_params = [{pipeline_mode = #tpu.pipeline_mode<synchronous>, transform_indices = @transform_0, window_bounds = array<i64: 16, 32>}, {pipeline_mode = #tpu.pipeline_mode<synchronous>, transform_indices = @transform_1, window_bounds = array<i64: 16, 16>}, {transform_indices = @transform_2, window_bounds = array<i64: 32, 128>}, {transform_indices = @transform_3, window_bounds = array<i64: 16, 128>}]} {
    %c0 = arith.constant 0 : index
    %c0_0 = arith.constant 0 : index
    %0 = vector.load %arg1[%c0, %c0_0] : memref<16x32xbf16, #tpu.memory_space<vmem>>, vector<16x32xbf16>
    %c0_1 = arith.constant 0 : index
    %c0_2 = arith.constant 0 : index
    %1 = vector.load %arg3[%c0_1, %c0_2] : memref<32x128xbf16, #tpu.memory_space<vmem>>, vector<32x128xbf16>
    %cst = arith.constant dense<0.000000e+00> : vector<16x128xf32>
    %2 = tpu.matmul %0, %1, %cst {dimension_numbers = #tpu.dot_dimension_numbers<[1], [0], [0], [1], [0, 0, 1, 1], [], []>} : vector<16x32xbf16>, vector<32x128xbf16>, vector<16x128xf32> -> vector<16x128xf32>
    %cst_3 = arith.constant 0.000000e+00 : f32
    %3 = vector.broadcast %cst_3 : f32 to vector<16x128xf32>
    %4 = arith.cmpf oge, %2, %3 : vector<16x128xf32>
    %cst_4 = arith.constant 1.000000e-01 : f32
    %5 = vector.broadcast %cst_4 : f32 to vector<16x128xf32>
    %6 = arith.mulf %2, %5 : vector<16x128xf32>
    %7 = arith.select %4, %2, %6 : vector<16x128xi1>, vector<16x128xf32>
    %c0_5 = arith.constant 0 : index
    %c0_6 = arith.constant 0 : index
    %8 = vector.load %arg2[%c0_5, %c0_6] : memref<16x16xbf16, #tpu.memory_space<vmem>>, vector<16x16xbf16>
    %9 = arith.truncf %7 : vector<16x128xf32> to vector<16x128xbf16>
    %cst_7 = arith.constant dense<0.000000e+00> : vector<16x128xf32>
    %10 = tpu.matmul %8, %9, %cst_7 {dimension_numbers = #tpu.dot_dimension_numbers<[1], [0], [0], [1], [0, 0, 1, 1], [], []>} : vector<16x16xbf16>, vector<16x128xbf16>, vector<16x128xf32> -> vector<16x128xf32>
    %cst_8 = arith.constant 0.000000e+00 : f32
    %11 = vector.broadcast %cst_8 : f32 to vector<16x128xf32>
    %12 = arith.cmpf oge, %10, %11 : vector<16x128xf32>
    %cst_9 = arith.constant 1.000000e-01 : f32
    %13 = vector.broadcast %cst_9 : f32 to vector<16x128xf32>
    %14 = arith.mulf %10, %13 : vector<16x128xf32>
    %15 = arith.select %12, %10, %14 : vector<16x128xi1>, vector<16x128xf32>
    %16 = arith.truncf %15 : vector<16x128xf32> to vector<16x128xbf16>
    %c0_10 = arith.constant 0 : index
    %c0_11 = arith.constant 0 : index
    %17 = vector.load %arg4[%c0_10, %c0_11] : memref<16x128xbf16, #tpu.memory_space<vmem>>, vector<16x128xbf16>
    tpu.vector_store %arg4[%c0_10, %c0_11], %16 {strides = array<i32>} : memref<16x128xbf16, #tpu.memory_space<vmem>>, vector<16x128xbf16>,
    return
  }
  func.func @transform_0(%arg0: i32) -> (i32, i32) {
    %c0_i32 = arith.constant 0 : i32
    %c0_i32_0 = arith.constant 0 : i32
    %c0_i32_1 = arith.constant 0 : i32
    return %c0_i32, %c0_i32_0 : i32, i32
  }
  func.func @transform_1(%arg0: i32) -> (i32, i32) {
    %c0_i32 = arith.constant 0 : i32
    %c0_i32_0 = arith.constant 0 : i32
    %c0_i32_1 = arith.constant 0 : i32
    return %c0_i32, %c0_i32_0 : i32, i32
  }
  func.func @transform_2(%arg0: i32) -> (i32, i32) {
    %c0_i32 = arith.constant 0 : i32
    %c0_i32_0 = arith.constant 0 : i32
    return %c0_i32, %arg0 : i32, i32
  }
  func.func @transform_3(%arg0: i32) -> (i32, i32) {
    %c0_i32 = arith.constant 0 : i32
    %c0_i32_0 = arith.constant 0 : i32
    return %c0_i32, %arg0 : i32, i32
  }
}

module attributes {stable_mosaic.version = 11 : i64} {
  func.func @_gemm_kernel(%arg0: i32, %arg1: memref<16x18xbf16, #tpu.memory_space<vmem>>, %arg2: memref<18x512xbf16, #tpu.memory_space<vmem>>, %arg3: memref<16x512xbf16, #tpu.memory_space<vmem>>) attributes {dimension_semantics = [#tpu.dimension_semantics<parallel>], iteration_bounds = array<i64: 1>, scalar_prefetch = 0 : i64, scratch_operands = 0 : i64, tpu.core_type = #tpu.core_type<tc>, window_params = [{pipeline_mode = #tpu.pipeline_mode<synchronous>, transform_indices = @transform_0, window_bounds = array<i64: 16, 18>}, {transform_indices = @transform_1, window_bounds = array<i64: 18, 512>}, {transform_indices = @transform_2, window_bounds = array<i64: 16, 512>}]} {
    %c0 = arith.constant 0 : index
    %c0_0 = arith.constant 0 : index
    %0 = vector.load %arg1[%c0, %c0_0] : memref<16x18xbf16, #tpu.memory_space<vmem>>, vector<16x18xbf16>
    %c0_1 = arith.constant 0 : index
    %c0_2 = arith.constant 0 : index
    %1 = vector.load %arg2[%c0_1, %c0_2] : memref<18x512xbf16, #tpu.memory_space<vmem>>, vector<18x512xbf16>
    %cst = arith.constant dense<0.000000e+00> : vector<16x512xf32>
    %2 = tpu.matmul %0, %1, %cst {dimension_numbers = #tpu.dot_dimension_numbers<[1], [0], [0], [1], [0, 0, 1, 1], [], []>} : vector<16x18xbf16>, vector<18x512xbf16>, vector<16x512xf32> -> vector<16x512xf32>
    %cst_3 = arith.constant 0.000000e+00 : f32
    %3 = vector.broadcast %cst_3 : f32 to vector<16x512xf32>
    %4 = arith.cmpf oge, %2, %3 : vector<16x512xf32>
    %cst_4 = arith.constant 1.000000e-01 : f32
    %5 = vector.broadcast %cst_4 : f32 to vector<16x512xf32>
    %6 = arith.mulf %2, %5 : vector<16x512xf32>
    %7 = arith.select %4, %2, %6 : vector<16x512xi1>, vector<16x512xf32>
    %8 = arith.truncf %7 : vector<16x512xf32> to vector<16x512xbf16>
    %c0_5 = arith.constant 0 : index
    %c0_6 = arith.constant 0 : index
    %9 = vector.load %arg3[%c0_5, %c0_6] : memref<16x512xbf16, #tpu.memory_space<vmem>>, vector<16x512xbf16>
    tpu.vector_store %arg3[%c0_5, %c0_6], %8 {strides = array<i32>} : memref<16x512xbf16, #tpu.memory_space<vmem>>, vector<16x512xbf16>,
    return
  }
  func.func @transform_0(%arg0: i32) -> (i32, i32) {
    %c0_i32 = arith.constant 0 : i32
    %c0_i32_0 = arith.constant 0 : i32
    %c0_i32_1 = arith.constant 0 : i32
    return %c0_i32, %c0_i32_0 : i32, i32
  }
  func.func @transform_1(%arg0: i32) -> (i32, i32) {
    %c0_i32 = arith.constant 0 : i32
    %c0_i32_0 = arith.constant 0 : i32
    return %c0_i32, %arg0 : i32, i32
  }
  func.func @transform_2(%arg0: i32) -> (i32, i32) {
    %c0_i32 = arith.constant 0 : i32
    %c0_i32_0 = arith.constant 0 : i32
    return %c0_i32, %arg0 : i32, i32
  }
}

module attributes {stable_mosaic.version = 11 : i64} {
  func.func @_gemm_kernel(%arg0: i32, %arg1: memref<16x72xbf16, #tpu.memory_space<vmem>>, %arg2: memref<72x512xbf16, #tpu.memory_space<vmem>>, %arg3: memref<16x512xbf16, #tpu.memory_space<vmem>>) attributes {dimension_semantics = [#tpu.dimension_semantics<parallel>], iteration_bounds = array<i64: 1>, scalar_prefetch = 0 : i64, scratch_operands = 0 : i64, tpu.core_type = #tpu.core_type<tc>, window_params = [{pipeline_mode = #tpu.pipeline_mode<synchronous>, transform_indices = @transform_0, window_bounds = array<i64: 16, 72>}, {transform_indices = @transform_1, window_bounds = array<i64: 72, 512>}, {transform_indices = @transform_2, window_bounds = array<i64: 16, 512>}]} {
    %c0 = arith.constant 0 : index
    %c0_0 = arith.constant 0 : index
    %0 = vector.load %arg1[%c0, %c0_0] : memref<16x72xbf16, #tpu.memory_space<vmem>>, vector<16x72xbf16>
    %c0_1 = arith.constant 0 : index
    %c0_2 = arith.constant 0 : index
    %1 = vector.load %arg2[%c0_1, %c0_2] : memref<72x512xbf16, #tpu.memory_space<vmem>>, vector<72x512xbf16>
    %cst = arith.constant dense<0.000000e+00> : vector<16x512xf32>
    %2 = tpu.matmul %0, %1, %cst {dimension_numbers = #tpu.dot_dimension_numbers<[1], [0], [0], [1], [0, 0, 1, 1], [], []>} : vector<16x72xbf16>, vector<72x512xbf16>, vector<16x512xf32> -> vector<16x512xf32>
    %3 = arith.truncf %2 : vector<16x512xf32> to vector<16x512xbf16>
    %c0_3 = arith.constant 0 : index
    %c0_4 = arith.constant 0 : index
    %4 = vector.load %arg3[%c0_3, %c0_4] : memref<16x512xbf16, #tpu.memory_space<vmem>>, vector<16x512xbf16>
    tpu.vector_store %arg3[%c0_3, %c0_4], %3 {strides = array<i32>} : memref<16x512xbf16, #tpu.memory_space<vmem>>, vector<16x512xbf16>,
    return
  }
  func.func @transform_0(%arg0: i32) -> (i32, i32) {
    %c0_i32 = arith.constant 0 : i32
    %c0_i32_0 = arith.constant 0 : i32
    %c0_i32_1 = arith.constant 0 : i32
    return %c0_i32, %c0_i32_0 : i32, i32
  }
  func.func @transform_1(%arg0: i32) -> (i32, i32) {
    %c0_i32 = arith.constant 0 : i32
    %c0_i32_0 = arith.constant 0 : i32
    return %c0_i32, %arg0 : i32, i32
  }
  func.func @transform_2(%arg0: i32) -> (i32, i32) {
    %c0_i32 = arith.constant 0 : i32
    %c0_i32_0 = arith.constant 0 : i32
    return %c0_i32, %arg0 : i32, i32
  }
}

</mosaic_0001>

<llo_original>
// kernel: cascade_disentg_group_fwd.27
$region0: #{cascade_disentg_group_fwd.27}
  #allocation0 [shape = 'u32[]', space=smem, size = 0x4, offset = 0x4, fixed_abs, tag = 'smem constant byte address 0x4 - core index']
  #allocation1 [shape = 'u32[144,128]{1,0:T(1,128)}', space=vmem, size = 0x12000, scoped, tag = 'internal scratch']
  %s0 = inlined_call_operand.vmem [shape: bf16[16,72], index: 0, kind: input, shape index: {}]
  %s1 = inlined_call_operand.vmem [shape: bf16[72,512], index: 1, kind: input, shape index: {}]
  %s2 = inlined_call_operand.vmem [shape: bf16[16,512], index: 2, kind: output, shape index: {}]
  %s3 = sld [smem:[#allocation0]]
  $region18: #{cascade_disentg_group_fwd.27} parent=0
    _
  %s5 = ssub.s32 1, %s3
  %s6 = scalar_select 0, %s5, %s3
  // Predicated region
  $region2: #{cascade_disentg_group_fwd.27} parent=0 // pred_check
    _
  $region3: #{cascade_disentg_group_fwd.27} parent=0 // pred_check_branch
    %8 = sbr.rel (0) target = $region5
  $region4: #{cascade_disentg_group_fwd.27} parent=0 // pred_region
    _
  $region5: #{cascade_disentg_group_fwd.27} parent=0 // pred_fallthru
    _
  // Predicated region
  $region6: #{cascade_disentg_group_fwd.27} parent=0 // pred_check
    _
  $region7: #{cascade_disentg_group_fwd.27} parent=0 // pred_check_branch
    %10 = sbr.rel (0) target = $region9
  $region8: #{cascade_disentg_group_fwd.27} parent=0 // pred_region
    _
  $region9: #{cascade_disentg_group_fwd.27} parent=0 // pred_fallthru
    _
  %v12 = vld [vmem:[%s0] sm:$0xf]
  %v13 = vld [vmem:[%s0 + $0x4] sm:$0xf]
  %v14 = vld [vmem:[%s1] sm:$0xff]
  %v15 = vld [vmem:[%s1 + $0x8] sm:$0xff]
  %v16 = vld [vmem:[%s1 + $0x10] sm:$0xff]
  %v17 = vld [vmem:[%s1 + $0x18] sm:$0xff]
  %v18 = vld [vmem:[%s1 + $0x20] sm:$0xff]
  %v19 = vld [vmem:[%s1 + $0x28] sm:$0xff]
  %v20 = vld [vmem:[%s1 + $0x30] sm:$0xff]
  %v21 = vld [vmem:[%s1 + $0x38] sm:$0xff]
  %v22 = vld [vmem:[%s1 + $0x40] sm:$0xff]
  %v23 = vld [vmem:[%s1 + $0x48] sm:$0xff]
  %v24 = vld [vmem:[%s1 + $0x50] sm:$0xff]
  %v25 = vld [vmem:[%s1 + $0x58] sm:$0xff]
  %v26 = vld [vmem:[%s1 + $0x60] sm:$0xff]
  %v27 = vld [vmem:[%s1 + $0x68] sm:$0xff]
  %v28 = vld [vmem:[%s1 + $0x70] sm:$0xff]
  %v29 = vld [vmem:[%s1 + $0x78] sm:$0xff]
  %v30 = vld [vmem:[%s1 + $0x80] sm:$0xff]
  %v31 = vld [vmem:[%s1 + $0x88] sm:$0xff]
  %v34 = vunpack.c.l.b16 %v12
  %v35 = vunpack.c.l.b16 %v13
  %v36 = vpack.c.b16 %v35, %v34
  %v55 = vunpack.c.l.b16 %v14
  %v56 = vunpack.c.h.b16 %v14
  %v57 = vunpack.c.l.b16 %v15
  %v58 = vunpack.c.h.b16 %v15
  %v59 = vunpack.c.l.b16 %v16
  %v60 = vunpack.c.h.b16 %v16
  %v61 = vunpack.c.l.b16 %v17
  %v62 = vunpack.c.h.b16 %v17
  %v63 = vunpack.c.l.b16 %v18
  %v64 = vunpack.c.h.b16 %v18
  %v65 = vunpack.c.l.b16 %v19
  %v66 = vunpack.c.h.b16 %v19
  %v67 = vunpack.c.l.b16 %v20
  %v68 = vunpack.c.h.b16 %v20
  %v69 = vunpack.c.l.b16 %v21
  %v70 = vunpack.c.h.b16 %v21
  %v71 = vunpack.c.l.b16 %v22
  %v72 = vunpack.c.h.b16 %v22
  %v73 = vunpack.c.l.b16 %v23
  %v74 = vunpack.c.h.b16 %v23
  %v75 = vunpack.c.l.b16 %v24
  %v76 = vunpack.c.h.b16 %v24
  %v77 = vunpack.c.l.b16 %v25
  %v78 = vunpack.c.h.b16 %v25
  %v79 = vunpack.c.l.b16 %v26
  %v80 = vunpack.c.h.b16 %v26
  %v81 = vunpack.c.l.b16 %v27
  %v82 = vunpack.c.h.b16 %v27
  %v83 = vunpack.c.l.b16 %v28
  %v84 = vunpack.c.h.b16 %v28
  %v85 = vunpack.c.l.b16 %v29
  %v86 = vunpack.c.h.b16 %v29
  %v87 = vunpack.c.l.b16 %v30
  %v88 = vunpack.c.h.b16 %v30
  %v89 = vunpack.c.l.b16 %v31
  %v90 = vunpack.c.h.b16 %v31
  %v91 = vpack.c.b16 %v59, %v55
  %v92 = vpack.c.b16 %v60, %v56
  %v93 = vpack.c.b16 %v61, %v57
  %v94 = vpack.c.b16 %v62, %v58
  %v95 = vpack.c.b16 %v67, %v63
  %v96 = vpack.c.b16 %v68, %v64
  %v97 = vpack.c.b16 %v69, %v65
  %v98 = vpack.c.b16 %v70, %v66
  %v99 = vpack.c.b16 %v75, %v71
  %v100 = vpack.c.b16 %v76, %v72
  %v101 = vpack.c.b16 %v77, %v73
  %v102 = vpack.c.b16 %v78, %v74
  %v103 = vpack.c.b16 %v83, %v79
  %v104 = vpack.c.b16 %v84, %v80
  %v105 = vpack.c.b16 %v85, %v81
  %v106 = vpack.c.b16 %v86, %v82
  %v107 = vpack.c.b16 %v87, %v87
  %v108 = vpack.c.b16 %v88, %v88
  %v109 = vpack.c.b16 %v89, %v89
  %v110 = vpack.c.b16 %v90, %v90
  %vm127 = vcmask 588800
  %v129 = vsel %vm127, %v36, 0
  %vm131 = vcmask 1043456
  %v133 = vsel %vm131, %v107, 0
  %v136 = vsel %vm131, %v108, 0
  %v139 = vsel %vm131, %v109, 0
  %v142 = vsel %vm131, %v110, 0
  %144 = vmatprep.subr.bf16.mxu0 %v92
  %145 = vmatpush1.bf16.msra.mxu0 %v91
  %146 = vmatprep.subr.bf16.mxu0 %v96
  %147 = vmatpush1.bf16.msra.mxu0 %v95
  %148 = vmatprep.subr.bf16.mxu0 %v100
  %149 = vmatpush1.bf16.msra.mxu0 %v99
  %150 = vmatprep.subr.bf16.mxu0 %v104
  %151 = vmatpush1.bf16.msra.mxu0 %v103
  %152 = vmatprep.subr.bf16.mxu0 %v136
  %153 = vmatpush1.bf16.msra.mxu0 %v133
  %154 = vmatprep.subr.bf16.mxu0 0
  %155 = vmatpush1.bf16.msra.mxu0 0
  %156 = vmatprep.subr.bf16.mxu0 0
  %157 = vmatpush1.bf16.msra.mxu0 0
  %158 = vmatprep.subr.bf16.mxu0 0
  %159 = vmatpush1.bf16.msra.mxu0 0
  %160 = vmatprep.subr.bf16.mxu0 0
  %161 = vmatpush1.bf16.msra.mxu0 0
  %162 = vmatprep.subr.bf16.mxu0 0
  %163 = vmatpush1.bf16.msra.mxu0 0
  %164 = vmatprep.subr.bf16.mxu0 0
  %165 = vmatpush1.bf16.msra.mxu0 0
  %166 = vmatprep.subr.bf16.mxu0 0
  %167 = vmatpush1.bf16.msra.mxu0 0
  %168 = vmatprep.subr.bf16.mxu0 0
  %169 = vmatpush1.bf16.msra.mxu0 0
  %170 = vmatprep.subr.bf16.mxu0 0
  %171 = vmatpush1.bf16.msra.mxu0 0
  %172 = vmatprep.subr.bf16.mxu0 0
  %173 = vmatpush1.bf16.msra.mxu0 0
  %174 = vmatprep.subr.bf16.mxu0 0
  %175 = vmatpush1.bf16.msra.mxu0 0
  %176 = vmatprep.mubr.bf16.mxu0 0
  %177 = vmatmul.mubr.bf16.gmra.mrb[0].mxu0 %v129
  %v178 = vpop.f32.mrb[0].mxu0
  %v179 = vadd.f32 0.0, %v178
  %v180 = vpop.f32.mrb[0].mxu0
  %v181 = vadd.f32 0.0, %v180
  %v182 = vpop.f32.mrb[0].mxu0
  %v183 = vadd.f32 0.0, %v182
  %v184 = vpop.f32.mrb[0].mxu0
  %v185 = vadd.f32 0.0, %v184
  %186 = vdwg.mxu0
  %187 = vmatprep.subr.bf16.mxu0 %v94
  %188 = vmatpush1.bf16.msra.mxu0 %v93
  %189 = vmatprep.subr.bf16.mxu0 %v98
  %190 = vmatpush1.bf16.msra.mxu0 %v97
  %191 = vmatprep.subr.bf16.mxu0 %v102
  %192 = vmatpush1.bf16.msra.mxu0 %v101
  %193 = vmatprep.subr.bf16.mxu0 %v106
  %194 = vmatpush1.bf16.msra.mxu0 %v105
  %195 = vmatprep.subr.bf16.mxu0 %v142
  %196 = vmatpush1.bf16.msra.mxu0 %v139
  %197 = vmatprep.subr.bf16.mxu0 0
  %198 = vmatpush1.bf16.msra.mxu0 0
  %199 = vmatprep.subr.bf16.mxu0 0
  %200 = vmatpush1.bf16.msra.mxu0 0
  %201 = vmatprep.subr.bf16.mxu0 0
  %202 = vmatpush1.bf16.msra.mxu0 0
  %203 = vmatprep.subr.bf16.mxu0 0
  %204 = vmatpush1.bf16.msra.mxu0 0
  %205 = vmatprep.subr.bf16.mxu0 0
  %206 = vmatpush1.bf16.msra.mxu0 0
  %207 = vmatprep.subr.bf16.mxu0 0
  %208 = vmatpush1.bf16.msra.mxu0 0
  %209 = vmatprep.subr.bf16.mxu0 0
  %210 = vmatpush1.bf16.msra.mxu0 0
  %211 = vmatprep.subr.bf16.mxu0 0
  %212 = vmatpush1.bf16.msra.mxu0 0
  %213 = vmatprep.subr.bf16.mxu0 0
  %214 = vmatpush1.bf16.msra.mxu0 0
  %215 = vmatprep.subr.bf16.mxu0 0
  %216 = vmatpush1.bf16.msra.mxu0 0
  %217 = vmatprep.subr.bf16.mxu0 0
  %218 = vmatpush1.bf16.msra.mxu0 0
  %219 = vmatprep.mubr.bf16.mxu0 0
  %220 = vmatmul.mubr.bf16.gmra.mrb[0].mxu0 %v129
  %v221 = vpop.f32.mrb[0].mxu0
  %v222 = vadd.f32 0.0, %v221
  %v223 = vpop.f32.mrb[0].mxu0
  %v224 = vadd.f32 0.0, %v223
  %v225 = vpop.f32.mrb[0].mxu0
  %v226 = vadd.f32 0.0, %v225
  %v227 = vpop.f32.mrb[0].mxu0
  %v228 = vadd.f32 0.0, %v227
  %229 = vdwg.mxu0
  %vm230 = vcmp.ge.f32.partialorder %v179, 0.0
  %vm231 = vcmp.ge.f32.partialorder %v181, 0.0
  %vm232 = vcmp.ge.f32.partialorder %v222, 0.0
  %vm233 = vcmp.ge.f32.partialorder %v224, 0.0
  %vm234 = vcmp.ge.f32.partialorder %v183, 0.0
  %vm235 = vcmp.ge.f32.partialorder %v185, 0.0
  %vm236 = vcmp.ge.f32.partialorder %v226, 0.0
  %vm237 = vcmp.ge.f32.partialorder %v228, 0.0
  %v238 = vmul.f32 %v179, 0.1
  %v239 = vmul.f32 %v181, 0.1
  %v240 = vmul.f32 %v222, 0.1
  %v241 = vmul.f32 %v224, 0.1
  %v242 = vmul.f32 %v183, 0.1
  %v243 = vmul.f32 %v185, 0.1
  %v244 = vmul.f32 %v226, 0.1
  %v245 = vmul.f32 %v228, 0.1
  %v246 = vsel %vm230, %v179, %v238
  %v247 = vsel %vm231, %v181, %v239
  %v248 = vsel %vm232, %v222, %v240
  %v249 = vsel %vm233, %v224, %v241
  %v250 = vsel %vm234, %v183, %v242
  %v251 = vsel %vm235, %v185, %v243
  %v252 = vsel %vm236, %v226, %v244
  %v253 = vsel %vm237, %v228, %v245
  %v254 = vpack.c.bf16 %v250, %v246
  %v255 = vpack.c.bf16 %v251, %v247
  %v256 = vpack.c.bf16 %v252, %v248
  %v257 = vpack.c.bf16 %v253, %v249
  %v262 = vunpack.c.l.b16 %v254
  %v263 = vunpack.c.l.b16 %v255
  %v264 = vunpack.c.l.b16 %v256
  %v265 = vunpack.c.l.b16 %v257
  %v266 = vunpack.c.h.b16 %v254
  %v267 = vunpack.c.h.b16 %v255
  %v268 = vunpack.c.h.b16 %v256
  %v269 = vunpack.c.h.b16 %v257
  %v270 = vpack.c.b16 %v263, %v262
  %v271 = vpack.c.b16 %v265, %v264
  %v272 = vpack.c.b16 %v267, %v266
  %v273 = vpack.c.b16 %v269, %v268
  %278 = vst [vmem:[%s2] sm:$0xff] %v270
  %279 = vst [vmem:[%s2 + $0x8] sm:$0xff] %v271
  %280 = vst [vmem:[%s2 + $0x10] sm:$0xff] %v272
  %281 = vst [vmem:[%s2 + $0x18] sm:$0xff] %v273
  // Predicated region
  $region10: #{cascade_disentg_group_fwd.27} parent=0 // pred_check
    _
  $region11: #{cascade_disentg_group_fwd.27} parent=0 // pred_check_branch
    %283 = sbr.rel (0) target = $region13
  $region12: #{cascade_disentg_group_fwd.27} parent=0 // pred_region
    _
  $region13: #{cascade_disentg_group_fwd.27} parent=0 // pred_fallthru
    _
  // Predicated region
  $region14: #{cascade_disentg_group_fwd.27} parent=0 // pred_check
    _
  $region15: #{cascade_disentg_group_fwd.27} parent=0 // pred_check_branch
    %285 = sbr.rel (0) target = $region17
  $region16: #{cascade_disentg_group_fwd.27} parent=0 // pred_region
    _
  $region17: #{cascade_disentg_group_fwd.27} parent=0 // pred_fallthru
    _

// kernel: cascade_disentg_group_fwd.30
$region0: #{cascade_disentg_group_fwd.30}
  #allocation0 [shape = 'u32[]', space=smem, size = 0x4, offset = 0x4, fixed_abs, tag = 'smem constant byte address 0x4 - core index']
  #allocation1 [shape = 'u32[144,128]{1,0:T(1,128)}', space=vmem, size = 0x12000, scoped, tag = 'internal scratch']
  %s0 = inlined_call_operand.vmem [shape: bf16[16,32], index: 0, kind: input, shape index: {}]
  %s1 = inlined_call_operand.vmem [shape: bf16[16,16], index: 1, kind: input, shape index: {}]
  %s2 = inlined_call_operand.vmem [shape: bf16[32,512], index: 2, kind: input, shape index: {}]
  %s3 = inlined_call_operand.vmem [shape: bf16[16,512], index: 3, kind: output, shape index: {}]
  %s4 = sld [smem:[#allocation0]]
  $region22: #{cascade_disentg_group_fwd.30} parent=0
    _
  %s6 = ssub.s32 1, %s4
  %s7 = scalar_select 0, %s6, %s4
  // Predicated region
  $region2: #{cascade_disentg_group_fwd.30} parent=0 // pred_check
    _
  $region3: #{cascade_disentg_group_fwd.30} parent=0 // pred_check_branch
    %9 = sbr.rel (0) target = $region5
  $region4: #{cascade_disentg_group_fwd.30} parent=0 // pred_region
    _
  $region5: #{cascade_disentg_group_fwd.30} parent=0 // pred_fallthru
    _
  // Predicated region
  $region6: #{cascade_disentg_group_fwd.30} parent=0 // pred_check
    _
  $region7: #{cascade_disentg_group_fwd.30} parent=0 // pred_check_branch
    %11 = sbr.rel (0) target = $region9
  $region8: #{cascade_disentg_group_fwd.30} parent=0 // pred_region
    _
  $region9: #{cascade_disentg_group_fwd.30} parent=0 // pred_fallthru
    _
  // Predicated region
  $region10: #{cascade_disentg_group_fwd.30} parent=0 // pred_check
    _
  $region11: #{cascade_disentg_group_fwd.30} parent=0 // pred_check_branch
    %13 = sbr.rel (0) target = $region13
  $region12: #{cascade_disentg_group_fwd.30} parent=0 // pred_region
    _
  $region13: #{cascade_disentg_group_fwd.30} parent=0 // pred_fallthru
    _
  %v15 = vld [vmem:[%s0] sm:$0xf]
  %v16 = vld [vmem:[%s0 + $0x4] sm:$0xf]
  %v17 = vld [vmem:[%s2] sm:$0xff]
  %v18 = vld [vmem:[%s2 + $0x8] sm:$0xff]
  %v19 = vld [vmem:[%s2 + $0x10] sm:$0xff]
  %v20 = vld [vmem:[%s2 + $0x18] sm:$0xff]
  %v21 = vld [vmem:[%s2 + $0x20] sm:$0xff]
  %v22 = vld [vmem:[%s2 + $0x28] sm:$0xff]
  %v23 = vld [vmem:[%s2 + $0x30] sm:$0xff]
  %v24 = vld [vmem:[%s2 + $0x38] sm:$0xff]
  %v27 = vunpack.c.l.b16 %v15
  %v28 = vunpack.c.l.b16 %v16
  %v29 = vpack.c.b16 %v28, %v27
  %v38 = vunpack.c.l.b16 %v17
  %v39 = vunpack.c.h.b16 %v17
  %v40 = vunpack.c.l.b16 %v18
  %v41 = vunpack.c.h.b16 %v18
  %v42 = vunpack.c.l.b16 %v19
  %v43 = vunpack.c.h.b16 %v19
  %v44 = vunpack.c.l.b16 %v20
  %v45 = vunpack.c.h.b16 %v20
  %v46 = vunpack.c.l.b16 %v21
  %v47 = vunpack.c.h.b16 %v21
  %v48 = vunpack.c.l.b16 %v22
  %v49 = vunpack.c.h.b16 %v22
  %v50 = vunpack.c.l.b16 %v23
  %v51 = vunpack.c.h.b16 %v23
  %v52 = vunpack.c.l.b16 %v24
  %v53 = vunpack.c.h.b16 %v24
  %v54 = vpack.c.b16 %v42, %v38
  %v55 = vpack.c.b16 %v43, %v39
  %v56 = vpack.c.b16 %v44, %v40
  %v57 = vpack.c.b16 %v45, %v41
  %v58 = vpack.c.b16 %v50, %v46
  %v59 = vpack.c.b16 %v51, %v47
  %v60 = vpack.c.b16 %v52, %v48
  %v61 = vpack.c.b16 %v53, %v49
  %vm70 = vcmask 261120
  %v72 = vsel %vm70, %v29, 0
  %74 = vmatprep.subr.bf16.mxu0 %v55
  %75 = vmatpush1.bf16.msra.mxu0 %v54
  %76 = vmatprep.subr.bf16.mxu0 %v59
  %77 = vmatpush1.bf16.msra.mxu0 %v58
  %78 = vmatprep.subr.bf16.mxu0 0
  %79 = vmatpush1.bf16.msra.mxu0 0
  %80 = vmatprep.subr.bf16.mxu0 0
  %81 = vmatpush1.bf16.msra.mxu0 0
  %82 = vmatprep.subr.bf16.mxu0 0
  %83 = vmatpush1.bf16.msra.mxu0 0
  %84 = vmatprep.subr.bf16.mxu0 0
  %85 = vmatpush1.bf16.msra.mxu0 0
  %86 = vmatprep.subr.bf16.mxu0 0
  %87 = vmatpush1.bf16.msra.mxu0 0
  %88 = vmatprep.subr.bf16.mxu0 0
  %89 = vmatpush1.bf16.msra.mxu0 0
  %90 = vmatprep.subr.bf16.mxu0 0
  %91 = vmatpush1.bf16.msra.mxu0 0
  %92 = vmatprep.subr.bf16.mxu0 0
  %93 = vmatpush1.bf16.msra.mxu0 0
  %94 = vmatprep.subr.bf16.mxu0 0
  %95 = vmatpush1.bf16.msra.mxu0 0
  %96 = vmatprep.subr.bf16.mxu0 0
  %97 = vmatpush1.bf16.msra.mxu0 0
  %98 = vmatprep.subr.bf16.mxu0 0
  %99 = vmatpush1.bf16.msra.mxu0 0
  %100 = vmatprep.subr.bf16.mxu0 0
  %101 = vmatpush1.bf16.msra.mxu0 0
  %102 = vmatprep.subr.bf16.mxu0 0
  %103 = vmatpush1.bf16.msra.mxu0 0
  %104 = vmatprep.subr.bf16.mxu0 0
  %105 = vmatpush1.bf16.msra.mxu0 0
  %106 = vmatprep.mubr.bf16.mxu0 0
  %107 = vmatmul.mubr.bf16.gmra.mrb[0].mxu0 %v72
  %v108 = vpop.f32.mrb[0].mxu0
  %v109 = vadd.f32 0.0, %v108
  %v110 = vpop.f32.mrb[0].mxu0
  %v111 = vadd.f32 0.0, %v110
  %v112 = vpop.f32.mrb[0].mxu0
  %v113 = vadd.f32 0.0, %v112
  %v114 = vpop.f32.mrb[0].mxu0
  %v115 = vadd.f32 0.0, %v114
  %116 = vdwg.mxu0
  %117 = vmatprep.subr.bf16.mxu0 %v57
  %118 = vmatpush1.bf16.msra.mxu0 %v56
  %119 = vmatprep.subr.bf16.mxu0 %v61
  %120 = vmatpush1.bf16.msra.mxu0 %v60
  %121 = vmatprep.subr.bf16.mxu0 0
  %122 = vmatpush1.bf16.msra.mxu0 0
  %123 = vmatprep.subr.bf16.mxu0 0
  %124 = vmatpush1.bf16.msra.mxu0 0
  %125 = vmatprep.subr.bf16.mxu0 0
  %126 = vmatpush1.bf16.msra.mxu0 0
  %127 = vmatprep.subr.bf16.mxu0 0
  %128 = vmatpush1.bf16.msra.mxu0 0
  %129 = vmatprep.subr.bf16.mxu0 0
  %130 = vmatpush1.bf16.msra.mxu0 0
  %131 = vmatprep.subr.bf16.mxu0 0
  %132 = vmatpush1.bf16.msra.mxu0 0
  %133 = vmatprep.subr.bf16.mxu0 0
  %134 = vmatpush1.bf16.msra.mxu0 0
  %135 = vmatprep.subr.bf16.mxu0 0
  %136 = vmatpush1.bf16.msra.mxu0 0
  %137 = vmatprep.subr.bf16.mxu0 0
  %138 = vmatpush1.bf16.msra.mxu0 0
  %139 = vmatprep.subr.bf16.mxu0 0
  %140 = vmatpush1.bf16.msra.mxu0 0
  %141 = vmatprep.subr.bf16.mxu0 0
  %142 = vmatpush1.bf16.msra.mxu0 0
  %143 = vmatprep.subr.bf16.mxu0 0
  %144 = vmatpush1.bf16.msra.mxu0 0
  %145 = vmatprep.subr.bf16.mxu0 0
  %146 = vmatpush1.bf16.msra.mxu0 0
  %147 = vmatprep.subr.bf16.mxu0 0
  %148 = vmatpush1.bf16.msra.mxu0 0
  %149 = vmatprep.mubr.bf16.mxu0 0
  %150 = vmatmul.mubr.bf16.gmra.mrb[0].mxu0 %v72
  %v151 = vpop.f32.mrb[0].mxu0
  %v152 = vadd.f32 0.0, %v151
  %v153 = vpop.f32.mrb[0].mxu0
  %v154 = vadd.f32 0.0, %v153
  %v155 = vpop.f32.mrb[0].mxu0
  %v156 = vadd.f32 0.0, %v155
  %v157 = vpop.f32.mrb[0].mxu0
  %v158 = vadd.f32 0.0, %v157
  %159 = vdwg.mxu0
  %vm160 = vcmp.ge.f32.partialorder %v109, 0.0
  %vm161 = vcmp.ge.f32.partialorder %v111, 0.0
  %vm162 = vcmp.ge.f32.partialorder %v152, 0.0
  %vm163 = vcmp.ge.f32.partialorder %v154, 0.0
  %vm164 = vcmp.ge.f32.partialorder %v113, 0.0
  %vm165 = vcmp.ge.f32.partialorder %v115, 0.0
  %vm166 = vcmp.ge.f32.partialorder %v156, 0.0
  %vm167 = vcmp.ge.f32.partialorder %v158, 0.0
  %v168 = vmul.f32 %v109, 0.1
  %v169 = vmul.f32 %v111, 0.1
  %v170 = vmul.f32 %v152, 0.1
  %v171 = vmul.f32 %v154, 0.1
  %v172 = vmul.f32 %v113, 0.1
  %v173 = vmul.f32 %v115, 0.1
  %v174 = vmul.f32 %v156, 0.1
  %v175 = vmul.f32 %v158, 0.1
  %v176 = vsel %vm160, %v109, %v168
  %v177 = vsel %vm161, %v111, %v169
  %v178 = vsel %vm162, %v152, %v170
  %v179 = vsel %vm163, %v154, %v171
  %v180 = vsel %vm164, %v113, %v172
  %v181 = vsel %vm165, %v115, %v173
  %v182 = vsel %vm166, %v156, %v174
  %v183 = vsel %vm167, %v158, %v175
  %v184 = vld [vmem:[%s1] sm:$0xf]
  %v185 = vld [vmem:[%s1 + $0x4] sm:$0xf]
  %v186 = vpack.c.bf16 %v180, %v176
  %v187 = vpack.c.bf16 %v181, %v177
  %v188 = vpack.c.bf16 %v182, %v178
  %v189 = vpack.c.bf16 %v183, %v179
  %v192 = vunpack.c.l.b16 %v184
  %v193 = vunpack.c.l.b16 %v185
  %v194 = vpack.c.b16 %v193, %v192
  %vm195 = vcmask 130048
  %v197 = vsel %vm195, %v194, 0
  %199 = vmatprep.subr.bf16.mxu0 %v187
  %200 = vmatpush1.bf16.msra.mxu0 %v186
  %201 = vmatprep.subr.bf16.mxu0 0
  %202 = vmatpush1.bf16.msra.mxu0 0
  %203 = vmatprep.subr.bf16.mxu0 0
  %204 = vmatpush1.bf16.msra.mxu0 0
  %205 = vmatprep.subr.bf16.mxu0 0
  %206 = vmatpush1.bf16.msra.mxu0 0
  %207 = vmatprep.subr.bf16.mxu0 0
  %208 = vmatpush1.bf16.msra.mxu0 0
  %209 = vmatprep.subr.bf16.mxu0 0
  %210 = vmatpush1.bf16.msra.mxu0 0
  %211 = vmatprep.subr.bf16.mxu0 0
  %212 = vmatpush1.bf16.msra.mxu0 0
  %213 = vmatprep.subr.bf16.mxu0 0
  %214 = vmatpush1.bf16.msra.mxu0 0
  %215 = vmatprep.subr.bf16.mxu0 0
  %216 = vmatpush1.bf16.msra.mxu0 0
  %217 = vmatprep.subr.bf16.mxu0 0
  %218 = vmatpush1.bf16.msra.mxu0 0
  %219 = vmatprep.subr.bf16.mxu0 0
  %220 = vmatpush1.bf16.msra.mxu0 0
  %221 = vmatprep.subr.bf16.mxu0 0
  %222 = vmatpush1.bf16.msra.mxu0 0
  %223 = vmatprep.subr.bf16.mxu0 0
  %224 = vmatpush1.bf16.msra.mxu0 0
  %225 = vmatprep.subr.bf16.mxu0 0
  %226 = vmatpush1.bf16.msra.mxu0 0
  %227 = vmatprep.subr.bf16.mxu0 0
  %228 = vmatpush1.bf16.msra.mxu0 0
  %229 = vmatprep.subr.bf16.mxu0 0
  %230 = vmatpush1.bf16.msra.mxu0 0
  %231 = vmatprep.mubr.bf16.mxu0 0
  %232 = vmatmul.mubr.bf16.gmra.mrb[0].mxu0 %v197
  %v233 = vpop.f32.mrb[0].mxu0
  %v234 = vadd.f32 0.0, %v233
  %v235 = vpop.f32.mrb[0].mxu0
  %v236 = vadd.f32 0.0, %v235
  %v237 = vpop.f32.mrb[0].mxu0
  %v238 = vadd.f32 0.0, %v237
  %v239 = vpop.f32.mrb[0].mxu0
  %v240 = vadd.f32 0.0, %v239
  %241 = vdwg.mxu0
  %242 = vmatprep.subr.bf16.mxu0 %v189
  %243 = vmatpush1.bf16.msra.mxu0 %v188
  %244 = vmatprep.subr.bf16.mxu0 0
  %245 = vmatpush1.bf16.msra.mxu0 0
  %246 = vmatprep.subr.bf16.mxu0 0
  %247 = vmatpush1.bf16.msra.mxu0 0
  %248 = vmatprep.subr.bf16.mxu0 0
  %249 = vmatpush1.bf16.msra.mxu0 0
  %250 = vmatprep.subr.bf16.mxu0 0
  %251 = vmatpush1.bf16.msra.mxu0 0
  %252 = vmatprep.subr.bf16.mxu0 0
  %253 = vmatpush1.bf16.msra.mxu0 0
  %254 = vmatprep.subr.bf16.mxu0 0
  %255 = vmatpush1.bf16.msra.mxu0 0
  %256 = vmatprep.subr.bf16.mxu0 0
  %257 = vmatpush1.bf16.msra.mxu0 0
  %258 = vmatprep.subr.bf16.mxu0 0
  %259 = vmatpush1.bf16.msra.mxu0 0
  %260 = vmatprep.subr.bf16.mxu0 0
  %261 = vmatpush1.bf16.msra.mxu0 0
  %262 = vmatprep.subr.bf16.mxu0 0
  %263 = vmatpush1.bf16.msra.mxu0 0
  %264 = vmatprep.subr.bf16.mxu0 0
  %265 = vmatpush1.bf16.msra.mxu0 0
  %266 = vmatprep.subr.bf16.mxu0 0
  %267 = vmatpush1.bf16.msra.mxu0 0
  %268 = vmatprep.subr.bf16.mxu0 0
  %269 = vmatpush1.bf16.msra.mxu0 0
  %270 = vmatprep.subr.bf16.mxu0 0
  %271 = vmatpush1.bf16.msra.mxu0 0
  %272 = vmatprep.subr.bf16.mxu0 0
  %273 = vmatpush1.bf16.msra.mxu0 0
  %274 = vmatprep.mubr.bf16.mxu0 0
  %275 = vmatmul.mubr.bf16.gmra.mrb[0].mxu0 %v197
  %v276 = vpop.f32.mrb[0].mxu0
  %v277 = vadd.f32 0.0, %v276
  %v278 = vpop.f32.mrb[0].mxu0
  %v279 = vadd.f32 0.0, %v278
  %v280 = vpop.f32.mrb[0].mxu0
  %v281 = vadd.f32 0.0, %v280
  %v282 = vpop.f32.mrb[0].mxu0
  %v283 = vadd.f32 0.0, %v282
  %284 = vdwg.mxu0
  %vm285 = vcmp.ge.f32.partialorder %v234, 0.0
  %vm286 = vcmp.ge.f32.partialorder %v236, 0.0
  %vm287 = vcmp.ge.f32.partialorder %v277, 0.0
  %vm288 = vcmp.ge.f32.partialorder %v279, 0.0
  %vm289 = vcmp.ge.f32.partialorder %v238, 0.0
  %vm290 = vcmp.ge.f32.partialorder %v240, 0.0
  %vm291 = vcmp.ge.f32.partialorder %v281, 0.0
  %vm292 = vcmp.ge.f32.partialorder %v283, 0.0
  %v293 = vmul.f32 %v234, 0.1
  %v294 = vmul.f32 %v236, 0.1
  %v295 = vmul.f32 %v277, 0.1
  %v296 = vmul.f32 %v279, 0.1
  %v297 = vmul.f32 %v238, 0.1
  %v298 = vmul.f32 %v240, 0.1
  %v299 = vmul.f32 %v281, 0.1
  %v300 = vmul.f32 %v283, 0.1
  %v301 = vsel %vm285, %v234, %v293
  %v302 = vsel %vm286, %v236, %v294
  %v303 = vsel %vm287, %v277, %v295
  %v304 = vsel %vm288, %v279, %v296
  %v305 = vsel %vm289, %v238, %v297
  %v306 = vsel %vm290, %v240, %v298
  %v307 = vsel %vm291, %v281, %v299
  %v308 = vsel %vm292, %v283, %v300
  %v309 = vpack.c.bf16 %v305, %v301
  %v310 = vpack.c.bf16 %v306, %v302
  %v311 = vpack.c.bf16 %v307, %v303
  %v312 = vpack.c.bf16 %v308, %v304
  %v317 = vunpack.c.l.b16 %v309
  %v318 = vunpack.c.l.b16 %v310
  %v319 = vunpack.c.l.b16 %v311
  %v320 = vunpack.c.l.b16 %v312
  %v321 = vunpack.c.h.b16 %v309
  %v322 = vunpack.c.h.b16 %v310
  %v323 = vunpack.c.h.b16 %v311
  %v324 = vunpack.c.h.b16 %v312
  %v325 = vpack.c.b16 %v318, %v317
  %v326 = vpack.c.b16 %v320, %v319
  %v327 = vpack.c.b16 %v322, %v321
  %v328 = vpack.c.b16 %v324, %v323
  %333 = vst [vmem:[%s3] sm:$0xff] %v325
  %334 = vst [vmem:[%s3 + $0x8] sm:$0xff] %v326
  %335 = vst [vmem:[%s3 + $0x10] sm:$0xff] %v327
  %336 = vst [vmem:[%s3 + $0x18] sm:$0xff] %v328
  // Predicated region
  $region14: #{cascade_disentg_group_fwd.30} parent=0 // pred_check
    _
  $region15: #{cascade_disentg_group_fwd.30} parent=0 // pred_check_branch
    %338 = sbr.rel (0) target = $region17
  $region16: #{cascade_disentg_group_fwd.30} parent=0 // pred_region
    _
  $region17: #{cascade_disentg_group_fwd.30} parent=0 // pred_fallthru
    _
  // Predicated region
  $region18: #{cascade_disentg_group_fwd.30} parent=0 // pred_check
    _
  $region19: #{cascade_disentg_group_fwd.30} parent=0 // pred_check_branch
    %340 = sbr.rel (0) target = $region21
  $region20: #{cascade_disentg_group_fwd.30} parent=0 // pred_region
    _
  $region21: #{cascade_disentg_group_fwd.30} parent=0 // pred_fallthru
    _

// kernel: cascade_disentg_group_fwd.29
$region0: #{cascade_disentg_group_fwd.29}
  #allocation0 [shape = 'u32[]', space=smem, size = 0x4, offset = 0x4, fixed_abs, tag = 'smem constant byte address 0x4 - core index']
  #allocation1 [shape = 'u32[144,128]{1,0:T(1,128)}', space=vmem, size = 0x12000, scoped, tag = 'internal scratch']
  %s0 = inlined_call_operand.vmem [shape: bf16[16,32], index: 0, kind: input, shape index: {}]
  %s1 = inlined_call_operand.vmem [shape: bf16[16,16], index: 1, kind: input, shape index: {}]
  %s2 = inlined_call_operand.vmem [shape: bf16[32,128], index: 2, kind: input, shape index: {}]
  %s3 = inlined_call_operand.vmem [shape: bf16[16,128], index: 3, kind: output, shape index: {}]
  %s4 = sld [smem:[#allocation0]]
  $region22: #{cascade_disentg_group_fwd.29} parent=0
    _
  %s6 = ssub.s32 1, %s4
  %s7 = scalar_select 0, %s6, %s4
  // Predicated region
  $region2: #{cascade_disentg_group_fwd.29} parent=0 // pred_check
    _
  $region3: #{cascade_disentg_group_fwd.29} parent=0 // pred_check_branch
    %9 = sbr.rel (0) target = $region5
  $region4: #{cascade_disentg_group_fwd.29} parent=0 // pred_region
    _
  $region5: #{cascade_disentg_group_fwd.29} parent=0 // pred_fallthru
    _
  // Predicated region
  $region6: #{cascade_disentg_group_fwd.29} parent=0 // pred_check
    _
  $region7: #{cascade_disentg_group_fwd.29} parent=0 // pred_check_branch
    %11 = sbr.rel (0) target = $region9
  $region8: #{cascade_disentg_group_fwd.29} parent=0 // pred_region
    _
  $region9: #{cascade_disentg_group_fwd.29} parent=0 // pred_fallthru
    _
  // Predicated region
  $region10: #{cascade_disentg_group_fwd.29} parent=0 // pred_check
    _
  $region11: #{cascade_disentg_group_fwd.29} parent=0 // pred_check_branch
    %13 = sbr.rel (0) target = $region13
  $region12: #{cascade_disentg_group_fwd.29} parent=0 // pred_region
    _
  $region13: #{cascade_disentg_group_fwd.29} parent=0 // pred_fallthru
    _
  %v15 = vld [vmem:[%s0] sm:$0xf]
  %v16 = vld [vmem:[%s0 + $0x4] sm:$0xf]
  %v17 = vld [vmem:[%s2] sm:$0xf]
  %v18 = vld [vmem:[%s2 + $0x4] sm:$0xf]
  %v19 = vld [vmem:[%s2 + $0x8] sm:$0xf]
  %v20 = vld [vmem:[%s2 + $0xc] sm:$0xf]
  %v23 = vunpack.c.l.b16 %v15
  %v24 = vunpack.c.l.b16 %v16
  %v25 = vpack.c.b16 %v24, %v23
  %v30 = vunpack.c.l.b16 %v17
  %v31 = vunpack.c.l.b16 %v18
  %v32 = vunpack.c.l.b16 %v19
  %v33 = vunpack.c.l.b16 %v20
  %v34 = vpack.c.b16 %v31, %v30
  %v35 = vpack.c.b16 %v33, %v32
  %vm38 = vcmask 261120
  %v40 = vsel %vm38, %v25, 0
  %42 = vmatprep.subr.bf16.mxu0 0
  %43 = vmatpush1.bf16.msra.mxu0 %v34
  %44 = vmatprep.subr.bf16.mxu0 0
  %45 = vmatpush1.bf16.msra.mxu0 %v35
  %46 = vmatprep.subr.bf16.mxu0 0
  %47 = vmatpush1.bf16.msra.mxu0 0
  %48 = vmatprep.subr.bf16.mxu0 0
  %49 = vmatpush1.bf16.msra.mxu0 0
  %50 = vmatprep.subr.bf16.mxu0 0
  %51 = vmatpush1.bf16.msra.mxu0 0
  %52 = vmatprep.subr.bf16.mxu0 0
  %53 = vmatpush1.bf16.msra.mxu0 0
  %54 = vmatprep.subr.bf16.mxu0 0
  %55 = vmatpush1.bf16.msra.mxu0 0
  %56 = vmatprep.subr.bf16.mxu0 0
  %57 = vmatpush1.bf16.msra.mxu0 0
  %58 = vmatprep.subr.bf16.mxu0 0
  %59 = vmatpush1.bf16.msra.mxu0 0
  %60 = vmatprep.subr.bf16.mxu0 0
  %61 = vmatpush1.bf16.msra.mxu0 0
  %62 = vmatprep.subr.bf16.mxu0 0
  %63 = vmatpush1.bf16.msra.mxu0 0
  %64 = vmatprep.subr.bf16.mxu0 0
  %65 = vmatpush1.bf16.msra.mxu0 0
  %66 = vmatprep.subr.bf16.mxu0 0
  %67 = vmatpush1.bf16.msra.mxu0 0
  %68 = vmatprep.subr.bf16.mxu0 0
  %69 = vmatpush1.bf16.msra.mxu0 0
  %70 = vmatprep.subr.bf16.mxu0 0
  %71 = vmatpush1.bf16.msra.mxu0 0
  %72 = vmatprep.subr.bf16.mxu0 0
  %73 = vmatpush1.bf16.msra.mxu0 0
  %74 = vmatprep.mubr.bf16.mxu0 0
  %75 = vmatmul.mubr.bf16.gmra.mrb[0].mxu0 %v40
  %v76 = vpop.f32.mrb[0].mxu0
  %v77 = vadd.f32 0.0, %v76
  %v78 = vpop.f32.mrb[0].mxu0
  %v79 = vpop.f32.mrb[0].mxu0
  %v80 = vadd.f32 0.0, %v79
  %v81 = vpop.f32.mrb[0].mxu0
  %82 = vdwg.mxu0
  %vm83 = vcmp.ge.f32.partialorder %v77, 0.0
  %vm84 = vcmp.ge.f32.partialorder %v80, 0.0
  %v85 = vmul.f32 %v77, 0.1
  %v86 = vmul.f32 %v80, 0.1
  %v87 = vsel %vm83, %v77, %v85
  %v88 = vsel %vm84, %v80, %v86
  %v89 = vld [vmem:[%s1] sm:$0xf]
  %v90 = vld [vmem:[%s1 + $0x4] sm:$0xf]
  %v91 = vpack.c.bf16 %v88, %v87
  %v94 = vunpack.c.l.b16 %v89
  %v95 = vunpack.c.l.b16 %v90
  %v96 = vpack.c.b16 %v95, %v94
  %vm97 = vcmask 130048
  %v99 = vsel %vm97, %v96, 0
  %101 = vmatprep.subr.bf16.mxu0 0
  %102 = vmatpush1.bf16.msra.mxu0 %v91
  %103 = vmatprep.subr.bf16.mxu0 0
  %104 = vmatpush1.bf16.msra.mxu0 0
  %105 = vmatprep.subr.bf16.mxu0 0
  %106 = vmatpush1.bf16.msra.mxu0 0
  %107 = vmatprep.subr.bf16.mxu0 0
  %108 = vmatpush1.bf16.msra.mxu0 0
  %109 = vmatprep.subr.bf16.mxu0 0
  %110 = vmatpush1.bf16.msra.mxu0 0
  %111 = vmatprep.subr.bf16.mxu0 0
  %112 = vmatpush1.bf16.msra.mxu0 0
  %113 = vmatprep.subr.bf16.mxu0 0
  %114 = vmatpush1.bf16.msra.mxu0 0
  %115 = vmatprep.subr.bf16.mxu0 0
  %116 = vmatpush1.bf16.msra.mxu0 0
  %117 = vmatprep.subr.bf16.mxu0 0
  %118 = vmatpush1.bf16.msra.mxu0 0
  %119 = vmatprep.subr.bf16.mxu0 0
  %120 = vmatpush1.bf16.msra.mxu0 0
  %121 = vmatprep.subr.bf16.mxu0 0
  %122 = vmatpush1.bf16.msra.mxu0 0
  %123 = vmatprep.subr.bf16.mxu0 0
  %124 = vmatpush1.bf16.msra.mxu0 0
  %125 = vmatprep.subr.bf16.mxu0 0
  %126 = vmatpush1.bf16.msra.mxu0 0
  %127 = vmatprep.subr.bf16.mxu0 0
  %128 = vmatpush1.bf16.msra.mxu0 0
  %129 = vmatprep.subr.bf16.mxu0 0
  %130 = vmatpush1.bf16.msra.mxu0 0
  %131 = vmatprep.subr.bf16.mxu0 0
  %132 = vmatpush1.bf16.msra.mxu0 0
  %133 = vmatprep.mubr.bf16.mxu0 0
  %134 = vmatmul.mubr.bf16.gmra.mrb[0].mxu0 %v99
  %v135 = vpop.f32.mrb[0].mxu0
  %v136 = vadd.f32 0.0, %v135
  %v137 = vpop.f32.mrb[0].mxu0
  %v138 = vpop.f32.mrb[0].mxu0
  %v139 = vadd.f32 0.0, %v138
  %v140 = vpop.f32.mrb[0].mxu0
  %141 = vdwg.mxu0
  %vm142 = vcmp.ge.f32.partialorder %v136, 0.0
  %vm143 = vcmp.ge.f32.partialorder %v139, 0.0
  %v144 = vmul.f32 %v136, 0.1
  %v145 = vmul.f32 %v139, 0.1
  %v146 = vsel %vm142, %v136, %v144
  %v147 = vsel %vm143, %v139, %v145
  %v148 = vpack.c.bf16 %v147, %v146
  %v150 = vunpack.c.l.b16 %v148
  %v151 = vunpack.c.h.b16 %v148
  %v152 = vpack.c.b16 %v150, %v150
  %v153 = vpack.c.b16 %v151, %v151
  %156 = vst [vmem:[%s3] sm:$0xf] %v152
  %157 = vst [vmem:[%s3 + $0x4] sm:$0xf] %v153
  // Predicated region
  $region14: #{cascade_disentg_group_fwd.29} parent=0 // pred_check
    _
  $region15: #{cascade_disentg_group_fwd.29} parent=0 // pred_check_branch
    %159 = sbr.rel (0) target = $region17
  $region16: #{cascade_disentg_group_fwd.29} parent=0 // pred_region
    _
  $region17: #{cascade_disentg_group_fwd.29} parent=0 // pred_fallthru
    _
  // Predicated region
  $region18: #{cascade_disentg_group_fwd.29} parent=0 // pred_check
    _
  $region19: #{cascade_disentg_group_fwd.29} parent=0 // pred_check_branch
    %161 = sbr.rel (0) target = $region21
  $region20: #{cascade_disentg_group_fwd.29} parent=0 // pred_region
    _
  $region21: #{cascade_disentg_group_fwd.29} parent=0 // pred_fallthru
    _

// kernel: cascade_disentg_group_fwd.31
$region0: #{cascade_disentg_group_fwd.31}
  #allocation0 [shape = 'u32[]', space=smem, size = 0x4, offset = 0x4, fixed_abs, tag = 'smem constant byte address 0x4 - core index']
  #allocation1 [shape = 'u32[144,128]{1,0:T(1,128)}', space=vmem, size = 0x12000, scoped, tag = 'internal scratch']
  %s0 = inlined_call_operand.vmem [shape: bf16[16,18], index: 0, kind: input, shape index: {}]
  %s1 = inlined_call_operand.vmem [shape: bf16[18,512], index: 1, kind: input, shape index: {}]
  %s2 = inlined_call_operand.vmem [shape: bf16[16,512], index: 2, kind: output, shape index: {}]
  %s3 = sld [smem:[#allocation0]]
  $region18: #{cascade_disentg_group_fwd.31} parent=0
    _
  %s5 = ssub.s32 1, %s3
  %s6 = scalar_select 0, %s5, %s3
  // Predicated region
  $region2: #{cascade_disentg_group_fwd.31} parent=0 // pred_check
    _
  $region3: #{cascade_disentg_group_fwd.31} parent=0 // pred_check_branch
    %8 = sbr.rel (0) target = $region5
  $region4: #{cascade_disentg_group_fwd.31} parent=0 // pred_region
    _
  $region5: #{cascade_disentg_group_fwd.31} parent=0 // pred_fallthru
    _
  // Predicated region
  $region6: #{cascade_disentg_group_fwd.31} parent=0 // pred_check
    _
  $region7: #{cascade_disentg_group_fwd.31} parent=0 // pred_check_branch
    %10 = sbr.rel (0) target = $region9
  $region8: #{cascade_disentg_group_fwd.31} parent=0 // pred_region
    _
  $region9: #{cascade_disentg_group_fwd.31} parent=0 // pred_fallthru
    _
  %v12 = vld [vmem:[%s0] sm:$0xf]
  %v13 = vld [vmem:[%s0 + $0x4] sm:$0xf]
  %v14 = vld [vmem:[%s1] sm:$0xff]
  %v15 = vld [vmem:[%s1 + $0x8] sm:$0xff]
  %v16 = vld [vmem:[%s1 + $0x10] sm:$0xff]
  %v17 = vld [vmem:[%s1 + $0x18] sm:$0xff]
  %v18 = vld [vmem:[%s1 + $0x20] sm:$0x11]
  %v19 = vld [vmem:[%s1 + $0x28] sm:$0x11]
  %v22 = vunpack.c.l.b16 %v12
  %v23 = vunpack.c.l.b16 %v13
  %v24 = vpack.c.b16 %v23, %v22
  %v31 = vunpack.c.l.b16 %v14
  %v32 = vunpack.c.h.b16 %v14
  %v33 = vunpack.c.l.b16 %v15
  %v34 = vunpack.c.h.b16 %v15
  %v35 = vunpack.c.l.b16 %v16
  %v36 = vunpack.c.h.b16 %v16
  %v37 = vunpack.c.l.b16 %v17
  %v38 = vunpack.c.h.b16 %v17
  %v39 = vunpack.c.l.b16 %v18
  %v40 = vunpack.c.h.b16 %v18
  %v41 = vunpack.c.l.b16 %v19
  %v42 = vunpack.c.h.b16 %v19
  %v43 = vpack.c.b16 %v35, %v31
  %v44 = vpack.c.b16 %v36, %v32
  %v45 = vpack.c.b16 %v37, %v33
  %v46 = vpack.c.b16 %v38, %v34
  %v47 = vpack.c.b16 %v39, %v39
  %v48 = vpack.c.b16 %v40, %v40
  %v49 = vpack.c.b16 %v41, %v41
  %v50 = vpack.c.b16 %v42, %v42
  %vm55 = vcmask 146432
  %v57 = vsel %vm55, %v24, 0
  %vm59 = vcmask 1040384
  %v61 = vsel %vm59, %v47, 0
  %v64 = vsel %vm59, %v48, 0
  %v67 = vsel %vm59, %v49, 0
  %v70 = vsel %vm59, %v50, 0
  %72 = vmatprep.subr.bf16.mxu0 %v44
  %73 = vmatpush1.bf16.msra.mxu0 %v43
  %74 = vmatprep.subr.bf16.mxu0 %v64
  %75 = vmatpush1.bf16.msra.mxu0 %v61
  %76 = vmatprep.subr.bf16.mxu0 0
  %77 = vmatpush1.bf16.msra.mxu0 0
  %78 = vmatprep.subr.bf16.mxu0 0
  %79 = vmatpush1.bf16.msra.mxu0 0
  %80 = vmatprep.subr.bf16.mxu0 0
  %81 = vmatpush1.bf16.msra.mxu0 0
  %82 = vmatprep.subr.bf16.mxu0 0
  %83 = vmatpush1.bf16.msra.mxu0 0
  %84 = vmatprep.subr.bf16.mxu0 0
  %85 = vmatpush1.bf16.msra.mxu0 0
  %86 = vmatprep.subr.bf16.mxu0 0
  %87 = vmatpush1.bf16.msra.mxu0 0
  %88 = vmatprep.subr.bf16.mxu0 0
  %89 = vmatpush1.bf16.msra.mxu0 0
  %90 = vmatprep.subr.bf16.mxu0 0
  %91 = vmatpush1.bf16.msra.mxu0 0
  %92 = vmatprep.subr.bf16.mxu0 0
  %93 = vmatpush1.bf16.msra.mxu0 0
  %94 = vmatprep.subr.bf16.mxu0 0
  %95 = vmatpush1.bf16.msra.mxu0 0
  %96 = vmatprep.subr.bf16.mxu0 0
  %97 = vmatpush1.bf16.msra.mxu0 0
  %98 = vmatprep.subr.bf16.mxu0 0
  %99 = vmatpush1.bf16.msra.mxu0 0
  %100 = vmatprep.subr.bf16.mxu0 0
  %101 = vmatpush1.bf16.msra.mxu0 0
  %102 = vmatprep.subr.bf16.mxu0 0
  %103 = vmatpush1.bf16.msra.mxu0 0
  %104 = vmatprep.mubr.bf16.mxu0 0
  %105 = vmatmul.mubr.bf16.gmra.mrb[0].mxu0 %v57
  %v106 = vpop.f32.mrb[0].mxu0
  %v107 = vadd.f32 0.0, %v106
  %v108 = vpop.f32.mrb[0].mxu0
  %v109 = vadd.f32 0.0, %v108
  %v110 = vpop.f32.mrb[0].mxu0
  %v111 = vadd.f32 0.0, %v110
  %v112 = vpop.f32.mrb[0].mxu0
  %v113 = vadd.f32 0.0, %v112
  %114 = vdwg.mxu0
  %115 = vmatprep.subr.bf16.mxu0 %v46
  %116 = vmatpush1.bf16.msra.mxu0 %v45
  %117 = vmatprep.subr.bf16.mxu0 %v70
  %118 = vmatpush1.bf16.msra.mxu0 %v67
  %119 = vmatprep.subr.bf16.mxu0 0
  %120 = vmatpush1.bf16.msra.mxu0 0
  %121 = vmatprep.subr.bf16.mxu0 0
  %122 = vmatpush1.bf16.msra.mxu0 0
  %123 = vmatprep.subr.bf16.mxu0 0
  %124 = vmatpush1.bf16.msra.mxu0 0
  %125 = vmatprep.subr.bf16.mxu0 0
  %126 = vmatpush1.bf16.msra.mxu0 0
  %127 = vmatprep.subr.bf16.mxu0 0
  %128 = vmatpush1.bf16.msra.mxu0 0
  %129 = vmatprep.subr.bf16.mxu0 0
  %130 = vmatpush1.bf16.msra.mxu0 0
  %131 = vmatprep.subr.bf16.mxu0 0
  %132 = vmatpush1.bf16.msra.mxu0 0
  %133 = vmatprep.subr.bf16.mxu0 0
  %134 = vmatpush1.bf16.msra.mxu0 0
  %135 = vmatprep.subr.bf16.mxu0 0
  %136 = vmatpush1.bf16.msra.mxu0 0
  %137 = vmatprep.subr.bf16.mxu0 0
  %138 = vmatpush1.bf16.msra.mxu0 0
  %139 = vmatprep.subr.bf16.mxu0 0
  %140 = vmatpush1.bf16.msra.mxu0 0
  %141 = vmatprep.subr.bf16.mxu0 0
  %142 = vmatpush1.bf16.msra.mxu0 0
  %143 = vmatprep.subr.bf16.mxu0 0
  %144 = vmatpush1.bf16.msra.mxu0 0
  %145 = vmatprep.subr.bf16.mxu0 0
  %146 = vmatpush1.bf16.msra.mxu0 0
  %147 = vmatprep.mubr.bf16.mxu0 0
  %148 = vmatmul.mubr.bf16.gmra.mrb[0].mxu0 %v57
  %v149 = vpop.f32.mrb[0].mxu0
  %v150 = vadd.f32 0.0, %v149
  %v151 = vpop.f32.mrb[0].mxu0
  %v152 = vadd.f32 0.0, %v151
  %v153 = vpop.f32.mrb[0].mxu0
  %v154 = vadd.f32 0.0, %v153
  %v155 = vpop.f32.mrb[0].mxu0
  %v156 = vadd.f32 0.0, %v155
  %157 = vdwg.mxu0
  %vm158 = vcmp.ge.f32.partialorder %v107, 0.0
  %vm159 = vcmp.ge.f32.partialorder %v109, 0.0
  %vm160 = vcmp.ge.f32.partialorder %v150, 0.0
  %vm161 = vcmp.ge.f32.partialorder %v152, 0.0
  %vm162 = vcmp.ge.f32.partialorder %v111, 0.0
  %vm163 = vcmp.ge.f32.partialorder %v113, 0.0
  %vm164 = vcmp.ge.f32.partialorder %v154, 0.0
  %vm165 = vcmp.ge.f32.partialorder %v156, 0.0
  %v166 = vmul.f32 %v107, 0.1
  %v167 = vmul.f32 %v109, 0.1
  %v168 = vmul.f32 %v150, 0.1
  %v169 = vmul.f32 %v152, 0.1
  %v170 = vmul.f32 %v111, 0.1
  %v171 = vmul.f32 %v113, 0.1
  %v172 = vmul.f32 %v154, 0.1
  %v173 = vmul.f32 %v156, 0.1
  %v174 = vsel %vm158, %v107, %v166
  %v175 = vsel %vm159, %v109, %v167
  %v176 = vsel %vm160, %v150, %v168
  %v177 = vsel %vm161, %v152, %v169
  %v178 = vsel %vm162, %v111, %v170
  %v179 = vsel %vm163, %v113, %v171
  %v180 = vsel %vm164, %v154, %v172
  %v181 = vsel %vm165, %v156, %v173
  %v182 = vpack.c.bf16 %v178, %v174
  %v183 = vpack.c.bf16 %v179, %v175
  %v184 = vpack.c.bf16 %v180, %v176
  %v185 = vpack.c.bf16 %v181, %v177
  %v190 = vunpack.c.l.b16 %v182
  %v191 = vunpack.c.l.b16 %v183
  %v192 = vunpack.c.l.b16 %v184
  %v193 = vunpack.c.l.b16 %v185
  %v194 = vunpack.c.h.b16 %v182
  %v195 = vunpack.c.h.b16 %v183
  %v196 = vunpack.c.h.b16 %v184
  %v197 = vunpack.c.h.b16 %v185
  %v198 = vpack.c.b16 %v191, %v190
  %v199 = vpack.c.b16 %v193, %v192
  %v200 = vpack.c.b16 %v195, %v194
  %v201 = vpack.c.b16 %v197, %v196
  %206 = vst [vmem:[%s2] sm:$0xff] %v198
  %207 = vst [vmem:[%s2 + $0x8] sm:$0xff] %v199
  %208 = vst [vmem:[%s2 + $0x10] sm:$0xff] %v200
  %209 = vst [vmem:[%s2 + $0x18] sm:$0xff] %v201
  // Predicated region
  $region10: #{cascade_disentg_group_fwd.31} parent=0 // pred_check
    _
  $region11: #{cascade_disentg_group_fwd.31} parent=0 // pred_check_branch
    %211 = sbr.rel (0) target = $region13
  $region12: #{cascade_disentg_group_fwd.31} parent=0 // pred_region
    _
  $region13: #{cascade_disentg_group_fwd.31} parent=0 // pred_fallthru
    _
  // Predicated region
  $region14: #{cascade_disentg_group_fwd.31} parent=0 // pred_check
    _
  $region15: #{cascade_disentg_group_fwd.31} parent=0 // pred_check_branch
    %213 = sbr.rel (0) target = $region17
  $region16: #{cascade_disentg_group_fwd.31} parent=0 // pred_region
    _
  $region17: #{cascade_disentg_group_fwd.31} parent=0 // pred_fallthru
    _

// kernel: cascade_disentg_group_fwd.32
$region0: #{cascade_disentg_group_fwd.32}
  #allocation0 [shape = 'u32[]', space=smem, size = 0x4, offset = 0x4, fixed_abs, tag = 'smem constant byte address 0x4 - core index']
  #allocation1 [shape = 'u32[144,128]{1,0:T(1,128)}', space=vmem, size = 0x12000, scoped, tag = 'internal scratch']
  %s0 = inlined_call_operand.vmem [shape: bf16[16,72], index: 0, kind: input, shape index: {}]
  %s1 = inlined_call_operand.vmem [shape: bf16[72,512], index: 1, kind: input, shape index: {}]
  %s2 = inlined_call_operand.vmem [shape: bf16[16,512], index: 2, kind: output, shape index: {}]
  %s3 = sld [smem:[#allocation0]]
  $region18: #{cascade_disentg_group_fwd.32} parent=0
    _
  %s5 = ssub.s32 1, %s3
  %s6 = scalar_select 0, %s5, %s3
  // Predicated region
  $region2: #{cascade_disentg_group_fwd.32} parent=0 // pred_check
    _
  $region3: #{cascade_disentg_group_fwd.32} parent=0 // pred_check_branch
    %8 = sbr.rel (0) target = $region5
  $region4: #{cascade_disentg_group_fwd.32} parent=0 // pred_region
    _
  $region5: #{cascade_disentg_group_fwd.32} parent=0 // pred_fallthru
    _
  // Predicated region
  $region6: #{cascade_disentg_group_fwd.32} parent=0 // pred_check
    _
  $region7: #{cascade_disentg_group_fwd.32} parent=0 // pred_check_branch
    %10 = sbr.rel (0) target = $region9
  $region8: #{cascade_disentg_group_fwd.32} parent=0 // pred_region
    _
  $region9: #{cascade_disentg_group_fwd.32} parent=0 // pred_fallthru
    _
  %v12 = vld [vmem:[%s0] sm:$0xf]
  %v13 = vld [vmem:[%s0 + $0x4] sm:$0xf]
  %v14 = vld [vmem:[%s1] sm:$0xff]
  %v15 = vld [vmem:[%s1 + $0x8] sm:$0xff]
  %v16 = vld [vmem:[%s1 + $0x10] sm:$0xff]
  %v17 = vld [vmem:[%s1 + $0x18] sm:$0xff]
  %v18 = vld [vmem:[%s1 + $0x20] sm:$0xff]
  %v19 = vld [vmem:[%s1 + $0x28] sm:$0xff]
  %v20 = vld [vmem:[%s1 + $0x30] sm:$0xff]
  %v21 = vld [vmem:[%s1 + $0x38] sm:$0xff]
  %v22 = vld [vmem:[%s1 + $0x40] sm:$0xff]
  %v23 = vld [vmem:[%s1 + $0x48] sm:$0xff]
  %v24 = vld [vmem:[%s1 + $0x50] sm:$0xff]
  %v25 = vld [vmem:[%s1 + $0x58] sm:$0xff]
  %v26 = vld [vmem:[%s1 + $0x60] sm:$0xff]
  %v27 = vld [vmem:[%s1 + $0x68] sm:$0xff]
  %v28 = vld [vmem:[%s1 + $0x70] sm:$0xff]
  %v29 = vld [vmem:[%s1 + $0x78] sm:$0xff]
  %v30 = vld [vmem:[%s1 + $0x80] sm:$0xff]
  %v31 = vld [vmem:[%s1 + $0x88] sm:$0xff]
  %v34 = vunpack.c.l.b16 %v12
  %v35 = vunpack.c.l.b16 %v13
  %v36 = vpack.c.b16 %v35, %v34
  %v55 = vunpack.c.l.b16 %v14
  %v56 = vunpack.c.h.b16 %v14
  %v57 = vunpack.c.l.b16 %v15
  %v58 = vunpack.c.h.b16 %v15
  %v59 = vunpack.c.l.b16 %v16
  %v60 = vunpack.c.h.b16 %v16
  %v61 = vunpack.c.l.b16 %v17
  %v62 = vunpack.c.h.b16 %v17
  %v63 = vunpack.c.l.b16 %v18
  %v64 = vunpack.c.h.b16 %v18
  %v65 = vunpack.c.l.b16 %v19
  %v66 = vunpack.c.h.b16 %v19
  %v67 = vunpack.c.l.b16 %v20
  %v68 = vunpack.c.h.b16 %v20
  %v69 = vunpack.c.l.b16 %v21
  %v70 = vunpack.c.h.b16 %v21
  %v71 = vunpack.c.l.b16 %v22
  %v72 = vunpack.c.h.b16 %v22
  %v73 = vunpack.c.l.b16 %v23
  %v74 = vunpack.c.h.b16 %v23
  %v75 = vunpack.c.l.b16 %v24
  %v76 = vunpack.c.h.b16 %v24
  %v77 = vunpack.c.l.b16 %v25
  %v78 = vunpack.c.h.b16 %v25
  %v79 = vunpack.c.l.b16 %v26
  %v80 = vunpack.c.h.b16 %v26
  %v81 = vunpack.c.l.b16 %v27
  %v82 = vunpack.c.h.b16 %v27
  %v83 = vunpack.c.l.b16 %v28
  %v84 = vunpack.c.h.b16 %v28
  %v85 = vunpack.c.l.b16 %v29
  %v86 = vunpack.c.h.b16 %v29
  %v87 = vunpack.c.l.b16 %v30
  %v88 = vunpack.c.h.b16 %v30
  %v89 = vunpack.c.l.b16 %v31
  %v90 = vunpack.c.h.b16 %v31
  %v91 = vpack.c.b16 %v59, %v55
  %v92 = vpack.c.b16 %v60, %v56
  %v93 = vpack.c.b16 %v61, %v57
  %v94 = vpack.c.b16 %v62, %v58
  %v95 = vpack.c.b16 %v67, %v63
  %v96 = vpack.c.b16 %v68, %v64
  %v97 = vpack.c.b16 %v69, %v65
  %v98 = vpack.c.b16 %v70, %v66
  %v99 = vpack.c.b16 %v75, %v71
  %v100 = vpack.c.b16 %v76, %v72
  %v101 = vpack.c.b16 %v77, %v73
  %v102 = vpack.c.b16 %v78, %v74
  %v103 = vpack.c.b16 %v83, %v79
  %v104 = vpack.c.b16 %v84, %v80
  %v105 = vpack.c.b16 %v85, %v81
  %v106 = vpack.c.b16 %v86, %v82
  %v107 = vpack.c.b16 %v87, %v87
  %v108 = vpack.c.b16 %v88, %v88
  %v109 = vpack.c.b16 %v89, %v89
  %v110 = vpack.c.b16 %v90, %v90
  %vm127 = vcmask 588800
  %v129 = vsel %vm127, %v36, 0
  %vm131 = vcmask 1043456
  %v133 = vsel %vm131, %v107, 0
  %v136 = vsel %vm131, %v108, 0
  %v139 = vsel %vm131, %v109, 0
  %v142 = vsel %vm131, %v110, 0
  %144 = vmatprep.subr.bf16.mxu0 %v92
  %145 = vmatpush1.bf16.msra.mxu0 %v91
  %146 = vmatprep.subr.bf16.mxu0 %v96
  %147 = vmatpush1.bf16.msra.mxu0 %v95
  %148 = vmatprep.subr.bf16.mxu0 %v100
  %149 = vmatpush1.bf16.msra.mxu0 %v99
  %150 = vmatprep.subr.bf16.mxu0 %v104
  %151 = vmatpush1.bf16.msra.mxu0 %v103
  %152 = vmatprep.subr.bf16.mxu0 %v136
  %153 = vmatpush1.bf16.msra.mxu0 %v133
  %154 = vmatprep.subr.bf16.mxu0 0
  %155 = vmatpush1.bf16.msra.mxu0 0
  %156 = vmatprep.subr.bf16.mxu0 0
  %157 = vmatpush1.bf16.msra.mxu0 0
  %158 = vmatprep.subr.bf16.mxu0 0
  %159 = vmatpush1.bf16.msra.mxu0 0
  %160 = vmatprep.subr.bf16.mxu0 0
  %161 = vmatpush1.bf16.msra.mxu0 0
  %162 = vmatprep.subr.bf16.mxu0 0
  %163 = vmatpush1.bf16.msra.mxu0 0
  %164 = vmatprep.subr.bf16.mxu0 0
  %165 = vmatpush1.bf16.msra.mxu0 0
  %166 = vmatprep.subr.bf16.mxu0 0
  %167 = vmatpush1.bf16.msra.mxu0 0
  %168 = vmatprep.subr.bf16.mxu0 0
  %169 = vmatpush1.bf16.msra.mxu0 0
  %170 = vmatprep.subr.bf16.mxu0 0
  %171 = vmatpush1.bf16.msra.mxu0 0
  %172 = vmatprep.subr.bf16.mxu0 0
  %173 = vmatpush1.bf16.msra.mxu0 0
  %174 = vmatprep.subr.bf16.mxu0 0
  %175 = vmatpush1.bf16.msra.mxu0 0
  %176 = vmatprep.mubr.bf16.mxu0 0
  %177 = vmatmul.mubr.bf16.gmra.mrb[0].mxu0 %v129
  %v178 = vpop.f32.mrb[0].mxu0
  %v179 = vadd.f32 0.0, %v178
  %v180 = vpop.f32.mrb[0].mxu0
  %v181 = vadd.f32 0.0, %v180
  %v182 = vpop.f32.mrb[0].mxu0
  %v183 = vadd.f32 0.0, %v182
  %v184 = vpop.f32.mrb[0].mxu0
  %v185 = vadd.f32 0.0, %v184
  %186 = vdwg.mxu0
  %187 = vmatprep.subr.bf16.mxu0 %v94
  %188 = vmatpush1.bf16.msra.mxu0 %v93
  %189 = vmatprep.subr.bf16.mxu0 %v98
  %190 = vmatpush1.bf16.msra.mxu0 %v97
  %191 = vmatprep.subr.bf16.mxu0 %v102
  %192 = vmatpush1.bf16.msra.mxu0 %v101
  %193 = vmatprep.subr.bf16.mxu0 %v106
  %194 = vmatpush1.bf16.msra.mxu0 %v105
  %195 = vmatprep.subr.bf16.mxu0 %v142
  %196 = vmatpush1.bf16.msra.mxu0 %v139
  %197 = vmatprep.subr.bf16.mxu0 0
  %198 = vmatpush1.bf16.msra.mxu0 0
  %199 = vmatprep.subr.bf16.mxu0 0
  %200 = vmatpush1.bf16.msra.mxu0 0
  %201 = vmatprep.subr.bf16.mxu0 0
  %202 = vmatpush1.bf16.msra.mxu0 0
  %203 = vmatprep.subr.bf16.mxu0 0
  %204 = vmatpush1.bf16.msra.mxu0 0
  %205 = vmatprep.subr.bf16.mxu0 0
  %206 = vmatpush1.bf16.msra.mxu0 0
  %207 = vmatprep.subr.bf16.mxu0 0
  %208 = vmatpush1.bf16.msra.mxu0 0
  %209 = vmatprep.subr.bf16.mxu0 0
  %210 = vmatpush1.bf16.msra.mxu0 0
  %211 = vmatprep.subr.bf16.mxu0 0
  %212 = vmatpush1.bf16.msra.mxu0 0
  %213 = vmatprep.subr.bf16.mxu0 0
  %214 = vmatpush1.bf16.msra.mxu0 0
  %215 = vmatprep.subr.bf16.mxu0 0
  %216 = vmatpush1.bf16.msra.mxu0 0
  %217 = vmatprep.subr.bf16.mxu0 0
  %218 = vmatpush1.bf16.msra.mxu0 0
  %219 = vmatprep.mubr.bf16.mxu0 0
  %220 = vmatmul.mubr.bf16.gmra.mrb[0].mxu0 %v129
  %v221 = vpop.f32.mrb[0].mxu0
  %v222 = vadd.f32 0.0, %v221
  %v223 = vpop.f32.mrb[0].mxu0
  %v224 = vadd.f32 0.0, %v223
  %v225 = vpop.f32.mrb[0].mxu0
  %v226 = vadd.f32 0.0, %v225
  %v227 = vpop.f32.mrb[0].mxu0
  %v228 = vadd.f32 0.0, %v227
  %229 = vdwg.mxu0
  %v230 = vpack.c.bf16 %v183, %v179
  %v231 = vpack.c.bf16 %v185, %v181
  %v232 = vpack.c.bf16 %v226, %v222
  %v233 = vpack.c.bf16 %v228, %v224
  %v238 = vunpack.c.l.b16 %v230
  %v239 = vunpack.c.l.b16 %v231
  %v240 = vunpack.c.l.b16 %v232
  %v241 = vunpack.c.l.b16 %v233
  %v242 = vunpack.c.h.b16 %v230
  %v243 = vunpack.c.h.b16 %v231
  %v244 = vunpack.c.h.b16 %v232
  %v245 = vunpack.c.h.b16 %v233
  %v246 = vpack.c.b16 %v239, %v238
  %v247 = vpack.c.b16 %v241, %v240
  %v248 = vpack.c.b16 %v243, %v242
  %v249 = vpack.c.b16 %v245, %v244
  %254 = vst [vmem:[%s2] sm:$0xff] %v246
  %255 = vst [vmem:[%s2 + $0x8] sm:$0xff] %v247
  %256 = vst [vmem:[%s2 + $0x10] sm:$0xff] %v248
  %257 = vst [vmem:[%s2 + $0x18] sm:$0xff] %v249
  // Predicated region
  $region10: #{cascade_disentg_group_fwd.32} parent=0 // pred_check
    _
  $region11: #{cascade_disentg_group_fwd.32} parent=0 // pred_check_branch
    %259 = sbr.rel (0) target = $region13
  $region12: #{cascade_disentg_group_fwd.32} parent=0 // pred_region
    _
  $region13: #{cascade_disentg_group_fwd.32} parent=0 // pred_fallthru
    _
  // Predicated region
  $region14: #{cascade_disentg_group_fwd.32} parent=0 // pred_check
    _
  $region15: #{cascade_disentg_group_fwd.32} parent=0 // pred_check_branch
    %261 = sbr.rel (0) target = $region17
  $region16: #{cascade_disentg_group_fwd.32} parent=0 // pred_region
    _
  $region17: #{cascade_disentg_group_fwd.32} parent=0 // pred_fallthru
    _

</llo_original>
